<compile_context>
chip_gen: v7x
topology: tpu7x:2x2x1
jax: 0.10.0
libtpu: 0.0.40
codegen_flags: <defaults>
</compile_context>

<pallas_src>
import functools

import jax
import jax.numpy as jnp
from jax.experimental import pallas as pl
from jax.experimental.pallas import tpu as pltpu


def _rnn_kernel(ids_ref,     # (S*Bp, 1)  int32 token ids (padded rows = 0)
                embw0_ref,   # (Vp, Hp)   embedding @ W_ih0^T + (b_ih0 + b_hh0)
                whh0_ref,    # (Hp, Hp)   layer-0 W_hh^T (zero padded)
                wih1_ref,    # (Hp, Hp)   layer-1 W_ih^T (zero padded)
                b1_ref,      # (1,  Hp)   b_ih1 + b_hh1  (zero padded)
                whh1_ref,    # (Hp, Hp)   layer-1 W_hh^T (zero padded)
                wh_ref,      # (Hp, Op)   fused dense head weight
                bh_ref,      # (1,  Op)   fused dense head bias
                out_ref,     # (S*Bp, Op)
                hs_ref,      # scratch (S*Bp, Hp)
                *, seq_len, batch_p):
    sb = ids_ref.shape[0]
    vp = embw0_ref.shape[0]
    hp = whh0_ref.shape[0]
    f32 = jnp.float32

    # ---- Embedding lookup fused with layer-0 input projection + bias --------
    # one_hot(ids) @ (E @ W_ih0^T + b0) selects exactly the per-token rows,
    # so this single MXU op replaces the gather AND the per-step x@W_ih matmul.
    ids = ids_ref[...]                                           # (S*Bp, 1) i32
    lane = jax.lax.broadcasted_iota(jnp.int32, (sb, vp), 1)
    one_hot = (lane == ids).astype(f32)                          # (S*Bp, Vp)
    xw0 = jnp.dot(one_hot, embw0_ref[...], preferred_element_type=f32)

    # ---- RNN layer 0: h_t = tanh(xw0[t] + h_{t-1} @ W_hh0^T) ----------------
    # batch_p == 8 -> every slice / store below is a full aligned (8,128) tile.
    whh0 = whh0_ref[...]
    h = jnp.zeros((batch_p, hp), f32)
    for t in range(seq_len):                                     # fully unrolled
        h = jnp.tanh(xw0[t * batch_p:(t + 1) * batch_p, :]
                     + jnp.dot(h, whh0, preferred_element_type=f32))
        hs_ref[t * batch_p:(t + 1) * batch_p, :] = h

    # ---- RNN layer 1: input projection + bias hoisted out of the loop -------
    xw1 = (jnp.dot(hs_ref[...], wih1_ref[...], preferred_element_type=f32)
           + b1_ref[...])
    whh1 = whh1_ref[...]
    h = jnp.zeros((batch_p, hp), f32)
    for t in range(seq_len):
        h = jnp.tanh(xw1[t * batch_p:(t + 1) * batch_p, :]
                     + jnp.dot(h, whh1, preferred_element_type=f32))
        hs_ref[t * batch_p:(t + 1) * batch_p, :] = h

    # ---- fused dense head: dense2(dropout(BN(dense1(h)))) == h @ Wf + bf ----
    out_ref[...] = (jnp.dot(hs_ref[...], wh_ref[...], preferred_element_type=f32)
                    + bh_ref[...])


def _round_up(n, m):
    return (n + m - 1) // m * m


def rnn_forward(x_ids, params):
    S, B = x_ids.shape
    V, E = params["embedding"].shape
    H = params["whh0"].shape[0]
    O = params["wd2"].shape[0]

    BP = _round_up(B, 8)       # sublane-aligned batch (padded rows independent)
    HP = _round_up(H, 128)     # lane-dense hidden dim
    OP = _round_up(O, 128)     # lane-dense output dim
    VP = _round_up(V, 128)     # lane-dense one-hot vocab dim

    hi = jax.lax.Precision.HIGHEST
    f32 = jnp.float32

    def pad2(a, rows, cols):
        a = a.astype(f32)
        return jnp.zeros((rows, cols), f32).at[:a.shape[0], :a.shape[1]].set(a)

    # Embedding fused with layer-0 input projection and layer-0 biases
    # (row-select by one-hot keeps this exact).
    embw0 = (jnp.dot(params["embedding"], params["wih0"].T, precision=hi)
             + (params["bih0"] + params["bhh0"])[None, :])              # (V, H)

    # Fused dense head: BN=Identity, activation=None, dropout=identity (eval).
    w_head = jnp.dot(params["wd1"].T, params["wd2"].T, precision=hi)    # (H, O)
    b_head = (jnp.dot(params["bd1"][None, :], params["wd2"].T, precision=hi)
              + params["bd2"][None, :])                                 # (1, O)

    # Pad batch with dummy token id 0; padded batch rows never mix with real
    # rows (RNN batch elements are independent) and are sliced away below.
    ids_p = jnp.zeros((S, BP), jnp.int32).at[:, :B].set(x_ids.astype(jnp.int32))

    inputs = (
        ids_p.reshape(S * BP, 1),
        pad2(embw0, VP, HP),
        pad2(params["whh0"].T, HP, HP),
        pad2(params["wih1"].T, HP, HP),
        pad2((params["bih1"] + params["bhh1"])[None, :], 1, HP),
        pad2(params["whh1"].T, HP, HP),
        pad2(w_head, HP, OP),
        pad2(b_head, 1, OP),
    )

    def full_spec(a):
        nd = a.ndim
        return pl.BlockSpec(a.shape, lambda i, _nd=nd: (0,) * _nd)

    kernel = functools.partial(_rnn_kernel, seq_len=S, batch_p=BP)

    out = pl.pallas_call(
        kernel,
        out_shape=jax.ShapeDtypeStruct((S * BP, OP), f32),
        grid=(1,),
        in_specs=[full_spec(a) for a in inputs],
        out_specs=pl.BlockSpec((S * BP, OP), lambda i: (0, 0)),
        scratch_shapes=[pltpu.VMEM((S * BP, HP), f32)],
        compiler_params=pltpu.CompilerParams(
            dimension_semantics=("arbitrary",)),
    )(*inputs)

    return out.reshape(S, BP, OP)[:, :B, :O]


def rnn_forward_ref(x_ids, params):
    """Pure-JAX reference matching PyTorch forward (inference)."""
    hi = jax.lax.Precision.HIGHEST
    x = jnp.take(params["embedding"], x_ids, axis=0)
    S, B, _ = x.shape
    H = params["whh0"].shape[0]

    def layer(inp, wih, whh, bih, bhh):
        def step(h, x_t):
            h = jnp.tanh(jnp.dot(x_t, wih.T, precision=hi) + bih
                         + jnp.dot(h, whh.T, precision=hi) + bhh)
            return h, h
        _, ys = jax.lax.scan(step, jnp.zeros((B, H), jnp.float32), inp)
        return ys

    h0 = layer(x, params["wih0"], params["whh0"], params["bih0"], params["bhh0"])
    h1 = layer(h0, params["wih1"], params["whh1"], params["bih1"], params["bhh1"])
    d1 = jnp.dot(h1, params["wd1"].T, precision=hi) + params["bd1"]
    d2 = jnp.dot(d1, params["wd2"].T, precision=hi) + params["bd2"]
    return d2


def init_params(key, vocab_size, embedding_dim, rnn_units, output_dim):
    keys = jax.random.split(key, 13)
    k = 1.0 / float(rnn_units) ** 0.5

    def u(kk, shape, bound):
        return jax.random.uniform(kk, shape, jnp.float32, -bound, bound)

    return dict(
        embedding=jax.random.normal(keys[0], (vocab_size, embedding_dim), jnp.float32),
        wih0=u(keys[1], (rnn_units, embedding_dim), k),
        whh0=u(keys[2], (rnn_units, rnn_units), k),
        bih0=u(keys[3], (rnn_units,), k),
        bhh0=u(keys[4], (rnn_units,), k),
        wih1=u(keys[5], (rnn_units, rnn_units), k),
        whh1=u(keys[6], (rnn_units, rnn_units), k),
        bih1=u(keys[7], (rnn_units,), k),
        bhh1=u(keys[8], (rnn_units,), k),
        wd1=u(keys[9], (rnn_units, rnn_units), k),
        bd1=u(keys[10], (rnn_units,), k),
        wd2=u(keys[11], (output_dim, rnn_units), k),
        bd2=u(keys[12], (output_dim,), k),
    )


if __name__ == "__main__":
    vocab_size, embedding_dim, rnn_units, output_dim = 50, 32, 64, 3
    S, B = 8, 2  # (seq_len, batch) -- PyTorch nn.RNN default batch_first=False

    key = jax.random.PRNGKey(0)
    pkey, xkey = jax.random.split(key)
    params = init_params(pkey, vocab_size, embedding_dim, rnn_units, output_dim)
    x_ids = jax.random.randint(xkey, (S, B), 0, vocab_size, dtype=jnp.int32)

    out = rnn_forward(x_ids, params)
    out = jax.block_until_ready(out)

    ref = rnn_forward_ref(x_ids, params)
    assert out.shape == (S, B, output_dim), out.shape
    assert jnp.allclose(out, ref, atol=5e-3, rtol=5e-3), "kernel/reference mismatch"
    print("KERNEL_OK")
</pallas_src>

<mosaic_0001>
module attributes {stable_mosaic.version = 11 : i64} {
  func.func @_rnn_kernel(%arg0: i32, %arg1: memref<64x1xi32, #tpu.memory_space<vmem>>, %arg2: memref<128x128xf32, #tpu.memory_space<vmem>>, %arg3: memref<128x128xf32, #tpu.memory_space<vmem>>, %arg4: memref<128x128xf32, #tpu.memory_space<vmem>>, %arg5: memref<1x128xf32, #tpu.memory_space<vmem>>, %arg6: memref<128x128xf32, #tpu.memory_space<vmem>>, %arg7: memref<128x128xf32, #tpu.memory_space<vmem>>, %arg8: memref<1x128xf32, #tpu.memory_space<vmem>>, %arg9: memref<64x128xf32, #tpu.memory_space<vmem>>, %arg10: memref<64x128xf32, #tpu.memory_space<vmem>>) attributes {dimension_semantics = [#tpu.dimension_semantics<arbitrary>], iteration_bounds = array<i64: 1>, scalar_prefetch = 0 : i64, scratch_operands = 1 : i64, tpu.core_type = #tpu.core_type<tc>, window_params = [{pipeline_mode = #tpu.pipeline_mode<synchronous>, transform_indices = @transform_0, window_bounds = array<i64: 64, 1>}, {pipeline_mode = #tpu.pipeline_mode<synchronous>, transform_indices = @transform_1, window_bounds = array<i64: 128, 128>}, {pipeline_mode = #tpu.pipeline_mode<synchronous>, transform_indices = @transform_2, window_bounds = array<i64: 128, 128>}, {pipeline_mode = #tpu.pipeline_mode<synchronous>, transform_indices = @transform_3, window_bounds = array<i64: 128, 128>}, {pipeline_mode = #tpu.pipeline_mode<synchronous>, transform_indices = @transform_4, window_bounds = array<i64: 1, 128>}, {pipeline_mode = #tpu.pipeline_mode<synchronous>, transform_indices = @transform_5, window_bounds = array<i64: 128, 128>}, {pipeline_mode = #tpu.pipeline_mode<synchronous>, transform_indices = @transform_6, window_bounds = array<i64: 128, 128>}, {pipeline_mode = #tpu.pipeline_mode<synchronous>, transform_indices = @transform_7, window_bounds = array<i64: 1, 128>}, {pipeline_mode = #tpu.pipeline_mode<synchronous>, transform_indices = @transform_8, window_bounds = array<i64: 64, 128>}]} {
    %c0 = arith.constant 0 : index
    %c0_0 = arith.constant 0 : index
    %0 = vector.load %arg1[%c0, %c0_0] : memref<64x1xi32, #tpu.memory_space<vmem>>, vector<64x1xi32>
    %1 = tpu.iota {dimensions = array<i32: 1>} : vector<64x128xi32>
    %2 = vector.broadcast %0 : vector<64x1xi32> to vector<64x128xi32>
    %3 = arith.cmpi eq, %1, %2 : vector<64x128xi32>
    %4 = arith.extui %3 : vector<64x128xi1> to vector<64x128xi32>
    %5 = arith.sitofp %4 : vector<64x128xi32> to vector<64x128xf32>
    %c0_1 = arith.constant 0 : index
    %c0_2 = arith.constant 0 : index
    %6 = vector.load %arg2[%c0_1, %c0_2] : memref<128x128xf32, #tpu.memory_space<vmem>>, vector<128x128xf32>
    %cst = arith.constant dense<0.000000e+00> : vector<64x128xf32>
    %7 = tpu.matmul %5, %6, %cst {dimension_numbers = #tpu.dot_dimension_numbers<[1], [0], [0], [1], [0, 0, 1, 1], [], []>} : vector<64x128xf32>, vector<128x128xf32>, vector<64x128xf32> -> vector<64x128xf32>
    %c0_3 = arith.constant 0 : index
    %c0_4 = arith.constant 0 : index
    %8 = vector.load %arg3[%c0_3, %c0_4] : memref<128x128xf32, #tpu.memory_space<vmem>>, vector<128x128xf32>
    %cst_5 = arith.constant 0.000000e+00 : f32
    %9 = vector.broadcast %cst_5 : f32 to vector<8x128xf32>
    %10 = vector.extract_strided_slice %7 {offsets = [0, 0], sizes = [8, 128], strides = [1, 1]} : vector<64x128xf32> to vector<8x128xf32>
    %cst_6 = arith.constant dense<0.000000e+00> : vector<8x128xf32>
    %11 = tpu.matmul %9, %8, %cst_6 {dimension_numbers = #tpu.dot_dimension_numbers<[1], [0], [0], [1], [0, 0, 1, 1], [], []>} : vector<8x128xf32>, vector<128x128xf32>, vector<8x128xf32> -> vector<8x128xf32>
    %12 = arith.addf %10, %11 : vector<8x128xf32>
    %13 = math.tanh %12 : vector<8x128xf32>
    %c0_7 = arith.constant 0 : index
    %c0_8 = arith.constant 0 : index
    %14 = vector.load %arg10[%c0_7, %c0_8] : memref<64x128xf32, #tpu.memory_space<vmem>>, vector<8x128xf32>
    tpu.vector_store %arg10[%c0_7, %c0_8], %13 {strides = array<i32>} : memref<64x128xf32, #tpu.memory_space<vmem>>, vector<8x128xf32>,
    %15 = vector.extract_strided_slice %7 {offsets = [8, 0], sizes = [8, 128], strides = [1, 1]} : vector<64x128xf32> to vector<8x128xf32>
    %cst_9 = arith.constant dense<0.000000e+00> : vector<8x128xf32>
    %16 = tpu.matmul %13, %8, %cst_9 {dimension_numbers = #tpu.dot_dimension_numbers<[1], [0], [0], [1], [0, 0, 1, 1], [], []>} : vector<8x128xf32>, vector<128x128xf32>, vector<8x128xf32> -> vector<8x128xf32>
    %17 = arith.addf %15, %16 : vector<8x128xf32>
    %18 = math.tanh %17 : vector<8x128xf32>
    %c8 = arith.constant 8 : index
    %c0_10 = arith.constant 0 : index
    %19 = vector.load %arg10[%c8, %c0_10] : memref<64x128xf32, #tpu.memory_space<vmem>>, vector<8x128xf32>
    tpu.vector_store %arg10[%c8, %c0_10], %18 {strides = array<i32>} : memref<64x128xf32, #tpu.memory_space<vmem>>, vector<8x128xf32>,
    %20 = vector.extract_strided_slice %7 {offsets = [16, 0], sizes = [8, 128], strides = [1, 1]} : vector<64x128xf32> to vector<8x128xf32>
    %cst_11 = arith.constant dense<0.000000e+00> : vector<8x128xf32>
    %21 = tpu.matmul %18, %8, %cst_11 {dimension_numbers = #tpu.dot_dimension_numbers<[1], [0], [0], [1], [0, 0, 1, 1], [], []>} : vector<8x128xf32>, vector<128x128xf32>, vector<8x128xf32> -> vector<8x128xf32>
    %22 = arith.addf %20, %21 : vector<8x128xf32>
    %23 = math.tanh %22 : vector<8x128xf32>
    %c16 = arith.constant 16 : index
    %c0_12 = arith.constant 0 : index
    %24 = vector.load %arg10[%c16, %c0_12] : memref<64x128xf32, #tpu.memory_space<vmem>>, vector<8x128xf32>
    tpu.vector_store %arg10[%c16, %c0_12], %23 {strides = array<i32>} : memref<64x128xf32, #tpu.memory_space<vmem>>, vector<8x128xf32>,
    %25 = vector.extract_strided_slice %7 {offsets = [24, 0], sizes = [8, 128], strides = [1, 1]} : vector<64x128xf32> to vector<8x128xf32>
    %cst_13 = arith.constant dense<0.000000e+00> : vector<8x128xf32>
    %26 = tpu.matmul %23, %8, %cst_13 {dimension_numbers = #tpu.dot_dimension_numbers<[1], [0], [0], [1], [0, 0, 1, 1], [], []>} : vector<8x128xf32>, vector<128x128xf32>, vector<8x128xf32> -> vector<8x128xf32>
    %27 = arith.addf %25, %26 : vector<8x128xf32>
    %28 = math.tanh %27 : vector<8x128xf32>
    %c24 = arith.constant 24 : index
    %c0_14 = arith.constant 0 : index
    %29 = vector.load %arg10[%c24, %c0_14] : memref<64x128xf32, #tpu.memory_space<vmem>>, vector<8x128xf32>
    tpu.vector_store %arg10[%c24, %c0_14], %28 {strides = array<i32>} : memref<64x128xf32, #tpu.memory_space<vmem>>, vector<8x128xf32>,
    %30 = vector.extract_strided_slice %7 {offsets = [32, 0], sizes = [8, 128], strides = [1, 1]} : vector<64x128xf32> to vector<8x128xf32>
    %cst_15 = arith.constant dense<0.000000e+00> : vector<8x128xf32>
    %31 = tpu.matmul %28, %8, %cst_15 {dimension_numbers = #tpu.dot_dimension_numbers<[1], [0], [0], [1], [0, 0, 1, 1], [], []>} : vector<8x128xf32>, vector<128x128xf32>, vector<8x128xf32> -> vector<8x128xf32>
    %32 = arith.addf %30, %31 : vector<8x128xf32>
    %33 = math.tanh %32 : vector<8x128xf32>
    %c32 = arith.constant 32 : index
    %c0_16 = arith.constant 0 : index
    %34 = vector.load %arg10[%c32, %c0_16] : memref<64x128xf32, #tpu.memory_space<vmem>>, vector<8x128xf32>
    tpu.vector_store %arg10[%c32, %c0_16], %33 {strides = array<i32>} : memref<64x128xf32, #tpu.memory_space<vmem>>, vector<8x128xf32>,
    %35 = vector.extract_strided_slice %7 {offsets = [40, 0], sizes = [8, 128], strides = [1, 1]} : vector<64x128xf32> to vector<8x128xf32>
    %cst_17 = arith.constant dense<0.000000e+00> : vector<8x128xf32>
    %36 = tpu.matmul %33, %8, %cst_17 {dimension_numbers = #tpu.dot_dimension_numbers<[1], [0], [0], [1], [0, 0, 1, 1], [], []>} : vector<8x128xf32>, vector<128x128xf32>, vector<8x128xf32> -> vector<8x128xf32>
    %37 = arith.addf %35, %36 : vector<8x128xf32>
    %38 = math.tanh %37 : vector<8x128xf32>
    %c40 = arith.constant 40 : index
    %c0_18 = arith.constant 0 : index
    %39 = vector.load %arg10[%c40, %c0_18] : memref<64x128xf32, #tpu.memory_space<vmem>>, vector<8x128xf32>
    tpu.vector_store %arg10[%c40, %c0_18], %38 {strides = array<i32>} : memref<64x128xf32, #tpu.memory_space<vmem>>, vector<8x128xf32>,
    %40 = vector.extract_strided_slice %7 {offsets = [48, 0], sizes = [8, 128], strides = [1, 1]} : vector<64x128xf32> to vector<8x128xf32>
    %cst_19 = arith.constant dense<0.000000e+00> : vector<8x128xf32>
    %41 = tpu.matmul %38, %8, %cst_19 {dimension_numbers = #tpu.dot_dimension_numbers<[1], [0], [0], [1], [0, 0, 1, 1], [], []>} : vector<8x128xf32>, vector<128x128xf32>, vector<8x128xf32> -> vector<8x128xf32>
    %42 = arith.addf %40, %41 : vector<8x128xf32>
    %43 = math.tanh %42 : vector<8x128xf32>
    %c48 = arith.constant 48 : index
    %c0_20 = arith.constant 0 : index
    %44 = vector.load %arg10[%c48, %c0_20] : memref<64x128xf32, #tpu.memory_space<vmem>>, vector<8x128xf32>
    tpu.vector_store %arg10[%c48, %c0_20], %43 {strides = array<i32>} : memref<64x128xf32, #tpu.memory_space<vmem>>, vector<8x128xf32>,
    %45 = vector.extract_strided_slice %7 {offsets = [56, 0], sizes = [8, 128], strides = [1, 1]} : vector<64x128xf32> to vector<8x128xf32>
    %cst_21 = arith.constant dense<0.000000e+00> : vector<8x128xf32>
    %46 = tpu.matmul %43, %8, %cst_21 {dimension_numbers = #tpu.dot_dimension_numbers<[1], [0], [0], [1], [0, 0, 1, 1], [], []>} : vector<8x128xf32>, vector<128x128xf32>, vector<8x128xf32> -> vector<8x128xf32>
    %47 = arith.addf %45, %46 : vector<8x128xf32>
    %48 = math.tanh %47 : vector<8x128xf32>
    %c56 = arith.constant 56 : index
    %c0_22 = arith.constant 0 : index
    %49 = vector.load %arg10[%c56, %c0_22] : memref<64x128xf32, #tpu.memory_space<vmem>>, vector<8x128xf32>
    tpu.vector_store %arg10[%c56, %c0_22], %48 {strides = array<i32>} : memref<64x128xf32, #tpu.memory_space<vmem>>, vector<8x128xf32>,
    %c0_23 = arith.constant 0 : index
    %c0_24 = arith.constant 0 : index
    %50 = vector.load %arg10[%c0_23, %c0_24] : memref<64x128xf32, #tpu.memory_space<vmem>>, vector<64x128xf32>
    %c0_25 = arith.constant 0 : index
    %c0_26 = arith.constant 0 : index
    %51 = vector.load %arg4[%c0_25, %c0_26] : memref<128x128xf32, #tpu.memory_space<vmem>>, vector<128x128xf32>
    %cst_27 = arith.constant dense<0.000000e+00> : vector<64x128xf32>
    %52 = tpu.matmul %50, %51, %cst_27 {dimension_numbers = #tpu.dot_dimension_numbers<[1], [0], [0], [1], [0, 0, 1, 1], [], []>} : vector<64x128xf32>, vector<128x128xf32>, vector<64x128xf32> -> vector<64x128xf32>
    %c0_28 = arith.constant 0 : index
    %c0_29 = arith.constant 0 : index
    %53 = vector.load %arg5[%c0_28, %c0_29] : memref<1x128xf32, #tpu.memory_space<vmem>>, vector<1x128xf32>
    %54 = vector.broadcast %53 : vector<1x128xf32> to vector<64x128xf32>
    %55 = arith.addf %52, %54 : vector<64x128xf32>
    %c0_30 = arith.constant 0 : index
    %c0_31 = arith.constant 0 : index
    %56 = vector.load %arg6[%c0_30, %c0_31] : memref<128x128xf32, #tpu.memory_space<vmem>>, vector<128x128xf32>
    %cst_32 = arith.constant 0.000000e+00 : f32
    %57 = vector.broadcast %cst_32 : f32 to vector<8x128xf32>
    %58 = vector.extract_strided_slice %55 {offsets = [0, 0], sizes = [8, 128], strides = [1, 1]} : vector<64x128xf32> to vector<8x128xf32>
    %cst_33 = arith.constant dense<0.000000e+00> : vector<8x128xf32>
    %59 = tpu.matmul %57, %56, %cst_33 {dimension_numbers = #tpu.dot_dimension_numbers<[1], [0], [0], [1], [0, 0, 1, 1], [], []>} : vector<8x128xf32>, vector<128x128xf32>, vector<8x128xf32> -> vector<8x128xf32>
    %60 = arith.addf %58, %59 : vector<8x128xf32>
    %61 = math.tanh %60 : vector<8x128xf32>
    %c0_34 = arith.constant 0 : index
    %c0_35 = arith.constant 0 : index
    %62 = vector.load %arg10[%c0_34, %c0_35] : memref<64x128xf32, #tpu.memory_space<vmem>>, vector<8x128xf32>
    tpu.vector_store %arg10[%c0_34, %c0_35], %61 {strides = array<i32>} : memref<64x128xf32, #tpu.memory_space<vmem>>, vector<8x128xf32>,
    %63 = vector.extract_strided_slice %55 {offsets = [8, 0], sizes = [8, 128], strides = [1, 1]} : vector<64x128xf32> to vector<8x128xf32>
    %cst_36 = arith.constant dense<0.000000e+00> : vector<8x128xf32>
    %64 = tpu.matmul %61, %56, %cst_36 {dimension_numbers = #tpu.dot_dimension_numbers<[1], [0], [0], [1], [0, 0, 1, 1], [], []>} : vector<8x128xf32>, vector<128x128xf32>, vector<8x128xf32> -> vector<8x128xf32>
    %65 = arith.addf %63, %64 : vector<8x128xf32>
    %66 = math.tanh %65 : vector<8x128xf32>
    %c8_37 = arith.constant 8 : index
    %c0_38 = arith.constant 0 : index
    %67 = vector.load %arg10[%c8_37, %c0_38] : memref<64x128xf32, #tpu.memory_space<vmem>>, vector<8x128xf32>
    tpu.vector_store %arg10[%c8_37, %c0_38], %66 {strides = array<i32>} : memref<64x128xf32, #tpu.memory_space<vmem>>, vector<8x128xf32>,
    %68 = vector.extract_strided_slice %55 {offsets = [16, 0], sizes = [8, 128], strides = [1, 1]} : vector<64x128xf32> to vector<8x128xf32>
    %cst_39 = arith.constant dense<0.000000e+00> : vector<8x128xf32>
    %69 = tpu.matmul %66, %56, %cst_39 {dimension_numbers = #tpu.dot_dimension_numbers<[1], [0], [0], [1], [0, 0, 1, 1], [], []>} : vector<8x128xf32>, vector<128x128xf32>, vector<8x128xf32> -> vector<8x128xf32>
    %70 = arith.addf %68, %69 : vector<8x128xf32>
    %71 = math.tanh %70 : vector<8x128xf32>
    %c16_40 = arith.constant 16 : index
    %c0_41 = arith.constant 0 : index
    %72 = vector.load %arg10[%c16_40, %c0_41] : memref<64x128xf32, #tpu.memory_space<vmem>>, vector<8x128xf32>
    tpu.vector_store %arg10[%c16_40, %c0_41], %71 {strides = array<i32>} : memref<64x128xf32, #tpu.memory_space<vmem>>, vector<8x128xf32>,
    %73 = vector.extract_strided_slice %55 {offsets = [24, 0], sizes = [8, 128], strides = [1, 1]} : vector<64x128xf32> to vector<8x128xf32>
    %cst_42 = arith.constant dense<0.000000e+00> : vector<8x128xf32>
    %74 = tpu.matmul %71, %56, %cst_42 {dimension_numbers = #tpu.dot_dimension_numbers<[1], [0], [0], [1], [0, 0, 1, 1], [], []>} : vector<8x128xf32>, vector<128x128xf32>, vector<8x128xf32> -> vector<8x128xf32>
    %75 = arith.addf %73, %74 : vector<8x128xf32>
    %76 = math.tanh %75 : vector<8x128xf32>
    %c24_43 = arith.constant 24 : index
    %c0_44 = arith.constant 0 : index
    %77 = vector.load %arg10[%c24_43, %c0_44] : memref<64x128xf32, #tpu.memory_space<vmem>>, vector<8x128xf32>
    tpu.vector_store %arg10[%c24_43, %c0_44], %76 {strides = array<i32>} : memref<64x128xf32, #tpu.memory_space<vmem>>, vector<8x128xf32>,
    %78 = vector.extract_strided_slice %55 {offsets = [32, 0], sizes = [8, 128], strides = [1, 1]} : vector<64x128xf32> to vector<8x128xf32>
    %cst_45 = arith.constant dense<0.000000e+00> : vector<8x128xf32>
    %79 = tpu.matmul %76, %56, %cst_45 {dimension_numbers = #tpu.dot_dimension_numbers<[1], [0], [0], [1], [0, 0, 1, 1], [], []>} : vector<8x128xf32>, vector<128x128xf32>, vector<8x128xf32> -> vector<8x128xf32>
    %80 = arith.addf %78, %79 : vector<8x128xf32>
    %81 = math.tanh %80 : vector<8x128xf32>
    %c32_46 = arith.constant 32 : index
    %c0_47 = arith.constant 0 : index
    %82 = vector.load %arg10[%c32_46, %c0_47] : memref<64x128xf32, #tpu.memory_space<vmem>>, vector<8x128xf32>
    tpu.vector_store %arg10[%c32_46, %c0_47], %81 {strides = array<i32>} : memref<64x128xf32, #tpu.memory_space<vmem>>, vector<8x128xf32>,
    %83 = vector.extract_strided_slice %55 {offsets = [40, 0], sizes = [8, 128], strides = [1, 1]} : vector<64x128xf32> to vector<8x128xf32>
    %cst_48 = arith.constant dense<0.000000e+00> : vector<8x128xf32>
    %84 = tpu.matmul %81, %56, %cst_48 {dimension_numbers = #tpu.dot_dimension_numbers<[1], [0], [0], [1], [0, 0, 1, 1], [], []>} : vector<8x128xf32>, vector<128x128xf32>, vector<8x128xf32> -> vector<8x128xf32>
    %85 = arith.addf %83, %84 : vector<8x128xf32>
    %86 = math.tanh %85 : vector<8x128xf32>
    %c40_49 = arith.constant 40 : index
    %c0_50 = arith.constant 0 : index
    %87 = vector.load %arg10[%c40_49, %c0_50] : memref<64x128xf32, #tpu.memory_space<vmem>>, vector<8x128xf32>
    tpu.vector_store %arg10[%c40_49, %c0_50], %86 {strides = array<i32>} : memref<64x128xf32, #tpu.memory_space<vmem>>, vector<8x128xf32>,
    %88 = vector.extract_strided_slice %55 {offsets = [48, 0], sizes = [8, 128], strides = [1, 1]} : vector<64x128xf32> to vector<8x128xf32>
    %cst_51 = arith.constant dense<0.000000e+00> : vector<8x128xf32>
    %89 = tpu.matmul %86, %56, %cst_51 {dimension_numbers = #tpu.dot_dimension_numbers<[1], [0], [0], [1], [0, 0, 1, 1], [], []>} : vector<8x128xf32>, vector<128x128xf32>, vector<8x128xf32> -> vector<8x128xf32>
    %90 = arith.addf %88, %89 : vector<8x128xf32>
    %91 = math.tanh %90 : vector<8x128xf32>
    %c48_52 = arith.constant 48 : index
    %c0_53 = arith.constant 0 : index
    %92 = vector.load %arg10[%c48_52, %c0_53] : memref<64x128xf32, #tpu.memory_space<vmem>>, vector<8x128xf32>
    tpu.vector_store %arg10[%c48_52, %c0_53], %91 {strides = array<i32>} : memref<64x128xf32, #tpu.memory_space<vmem>>, vector<8x128xf32>,
    %93 = vector.extract_strided_slice %55 {offsets = [56, 0], sizes = [8, 128], strides = [1, 1]} : vector<64x128xf32> to vector<8x128xf32>
    %cst_54 = arith.constant dense<0.000000e+00> : vector<8x128xf32>
    %94 = tpu.matmul %91, %56, %cst_54 {dimension_numbers = #tpu.dot_dimension_numbers<[1], [0], [0], [1], [0, 0, 1, 1], [], []>} : vector<8x128xf32>, vector<128x128xf32>, vector<8x128xf32> -> vector<8x128xf32>
    %95 = arith.addf %93, %94 : vector<8x128xf32>
    %96 = math.tanh %95 : vector<8x128xf32>
    %c56_55 = arith.constant 56 : index
    %c0_56 = arith.constant 0 : index
    %97 = vector.load %arg10[%c56_55, %c0_56] : memref<64x128xf32, #tpu.memory_space<vmem>>, vector<8x128xf32>
    tpu.vector_store %arg10[%c56_55, %c0_56], %96 {strides = array<i32>} : memref<64x128xf32, #tpu.memory_space<vmem>>, vector<8x128xf32>,
    %c0_57 = arith.constant 0 : index
    %c0_58 = arith.constant 0 : index
    %98 = vector.load %arg10[%c0_57, %c0_58] : memref<64x128xf32, #tpu.memory_space<vmem>>, vector<64x128xf32>
    %c0_59 = arith.constant 0 : index
    %c0_60 = arith.constant 0 : index
    %99 = vector.load %arg7[%c0_59, %c0_60] : memref<128x128xf32, #tpu.memory_space<vmem>>, vector<128x128xf32>
    %cst_61 = arith.constant dense<0.000000e+00> : vector<64x128xf32>
    %100 = tpu.matmul %98, %99, %cst_61 {dimension_numbers = #tpu.dot_dimension_numbers<[1], [0], [0], [1], [0, 0, 1, 1], [], []>} : vector<64x128xf32>, vector<128x128xf32>, vector<64x128xf32> -> vector<64x128xf32>
    %c0_62 = arith.constant 0 : index
    %c0_63 = arith.constant 0 : index
    %101 = vector.load %arg8[%c0_62, %c0_63] : memref<1x128xf32, #tpu.memory_space<vmem>>, vector<1x128xf32>
    %102 = vector.broadcast %101 : vector<1x128xf32> to vector<64x128xf32>
    %103 = arith.addf %100, %102 : vector<64x128xf32>
    %c0_64 = arith.constant 0 : index
    %c0_65 = arith.constant 0 : index
    %104 = vector.load %arg9[%c0_64, %c0_65] : memref<64x128xf32, #tpu.memory_space<vmem>>, vector<64x128xf32>
    tpu.vector_store %arg9[%c0_64, %c0_65], %103 {strides = array<i32>} : memref<64x128xf32, #tpu.memory_space<vmem>>, vector<64x128xf32>,
    return
  }
  func.func @transform_0(%arg0: i32) -> (i32, i32) {
    %c0_i32 = arith.constant 0 : i32
    %c0_i32_0 = arith.constant 0 : i32
    %c0_i32_1 = arith.constant 0 : i32
    return %c0_i32, %c0_i32_0 : i32, i32
  }
  func.func @transform_1(%arg0: i32) -> (i32, i32) {
    %c0_i32 = arith.constant 0 : i32
    %c0_i32_0 = arith.constant 0 : i32
    %c0_i32_1 = arith.constant 0 : i32
    return %c0_i32, %c0_i32_0 : i32, i32
  }
  func.func @transform_2(%arg0: i32) -> (i32, i32) {
    %c0_i32 = arith.constant 0 : i32
    %c0_i32_0 = arith.constant 0 : i32
    %c0_i32_1 = arith.constant 0 : i32
    return %c0_i32, %c0_i32_0 : i32, i32
  }
  func.func @transform_3(%arg0: i32) -> (i32, i32) {
    %c0_i32 = arith.constant 0 : i32
    %c0_i32_0 = arith.constant 0 : i32
    %c0_i32_1 = arith.constant 0 : i32
    return %c0_i32, %c0_i32_0 : i32, i32
  }
  func.func @transform_4(%arg0: i32) -> (i32, i32) {
    %c0_i32 = arith.constant 0 : i32
    %c0_i32_0 = arith.constant 0 : i32
    %c0_i32_1 = arith.constant 0 : i32
    return %c0_i32, %c0_i32_0 : i32, i32
  }
  func.func @transform_5(%arg0: i32) -> (i32, i32) {
    %c0_i32 = arith.constant 0 : i32
    %c0_i32_0 = arith.constant 0 : i32
    %c0_i32_1 = arith.constant 0 : i32
    return %c0_i32, %c0_i32_0 : i32, i32
  }
  func.func @transform_6(%arg0: i32) -> (i32, i32) {
    %c0_i32 = arith.constant 0 : i32
    %c0_i32_0 = arith.constant 0 : i32
    %c0_i32_1 = arith.constant 0 : i32
    return %c0_i32, %c0_i32_0 : i32, i32
  }
  func.func @transform_7(%arg0: i32) -> (i32, i32) {
    %c0_i32 = arith.constant 0 : i32
    %c0_i32_0 = arith.constant 0 : i32
    %c0_i32_1 = arith.constant 0 : i32
    return %c0_i32, %c0_i32_0 : i32, i32
  }
  func.func @transform_8(%arg0: i32) -> (i32, i32) {
    %c0_i32 = arith.constant 0 : i32
    %c0_i32_0 = arith.constant 0 : i32
    %c0_i32_1 = arith.constant 0 : i32
    return %c0_i32, %c0_i32_0 : i32, i32
  }
}

</mosaic_0001>

<llo_original>
// kernel: tpu_custom_call.1
$region0: #{tpu_custom_call.1}
  #allocation0 [shape = 'u32[]', space=smem, size = 0x4, offset = 0x4, fixed_abs, tag = 'smem constant byte address 0x4 - core index']
  #allocation1 [shape = 'u32[144,128]{1,0:T(1,128)}', space=vmem, size = 0x12000, scoped, tag = 'internal scratch']
  #allocation2 [shape = 'f32[64,128]{1,0:T(8,128)}', space=vmem, size = 0x8000, scoped, tag = 'scratch operand']
  %s0 = inlined_call_operand.vmem [shape: s32[64,1], index: 0, kind: input, shape index: {}]
  %s1 = inlined_call_operand.hbm [shape: f32[128,128], index: 1, kind: input, shape index: {}]
  %s2 = inlined_call_operand.hbm [shape: f32[128,128], index: 2, kind: input, shape index: {}]
  %s3 = inlined_call_operand.hbm [shape: f32[128,128], index: 3, kind: input, shape index: {}]
  %s4 = inlined_call_operand.vmem [shape: f32[1,128], index: 4, kind: input, shape index: {}]
  %s5 = inlined_call_operand.hbm [shape: f32[128,128], index: 5, kind: input, shape index: {}]
  %s6 = inlined_call_operand.hbm [shape: f32[128,128], index: 6, kind: input, shape index: {}]
  %s7 = inlined_call_operand.vmem [shape: f32[1,128], index: 7, kind: input, shape index: {}]
  %s8 = inlined_call_operand.hbm [shape: f32[64,128], index: 8, kind: output, shape index: {}]
  %s9 = sld [smem:[#allocation0]]
  $region62: #{tpu_custom_call.1} parent=0
    _
  %s11 = ssub.s32 1, %s9
  %s12 = scalar_select 0, %s11, %s9
  $region1: #{tpu_custom_call.1} parent=0
    #allocation3 [shape = 'u8[65536]{0}', space=vmem, size = 0x10000, scoped, tag = 'input window, operand 1, single buffered']
    #allocation4 [shape = 's32[1]{0}', space=sflag, size = 0x4, scoped, tag = 'scoped memory for tpu_custom_call.1']
    #allocation5 [shape = 's32[1]{0}', space=sflag, size = 0x4, scoped, tag = 'scoped memory for tpu_custom_call.1']
    #allocation6 [shape = 'u8[65536]{0}', space=vmem, size = 0x10000, scoped, tag = 'input window, operand 2, single buffered']
    #allocation7 [shape = 's32[1]{0}', space=sflag, size = 0x4, scoped, tag = 'scoped memory for tpu_custom_call.1']
    #allocation8 [shape = 'u8[65536]{0}', space=vmem, size = 0x10000, scoped, tag = 'input window, operand 3, single buffered']
    #allocation9 [shape = 'u8[65536]{0}', space=vmem, size = 0x10000, scoped, tag = 'input window, operand 5, single buffered']
    #allocation10 [shape = 's32[1]{0}', space=sflag, size = 0x4, scoped, tag = 'scoped memory for tpu_custom_call.1']
    #allocation11 [shape = 'u8[65536]{0}', space=vmem, size = 0x10000, scoped, tag = 'input window, operand 6, single buffered']
    #allocation12 [shape = 'u8[32768]{0}', space=vmem, size = 0x8000, scoped, tag = 'output window, operand 0, single buffered']
    %13 = vsyncpa [#allocation4], 0
    %14 = vsyncpa [#allocation7], 0
    %15 = vsyncpa [#allocation10], 0
    %16 = vsyncpa [#allocation5], 0
    // Predicated region
    $region2: #{tpu_custom_call.1} parent=1 // pred_check
      _
    $region3: #{tpu_custom_call.1} parent=1 // pred_check_branch
      %18 = sbr.rel (0) target = $region5
    $region4: #{tpu_custom_call.1} parent=1 // pred_region
      _
    $region5: #{tpu_custom_call.1} parent=1 // pred_fallthru
      _
    // Predicated region
    $region6: #{tpu_custom_call.1} parent=1 // pred_check
      _
    $region7: #{tpu_custom_call.1} parent=1 // pred_check_branch
      %20 = sbr.rel (0) target = $region9
    $region8: #{tpu_custom_call.1} parent=1 // pred_region
      %s22 = ssub.s32 2048, 2048
      %23 = vsyncadd [#allocation4], %s22
      %s24 = sshll.u32 [#allocation3], 4
      %s25 = int_to_ptr.vmem [resolvable:$true] %s24
      %30 = dma.hbm_to_vmem [thread:$0]  %s1, 2048, %s25, [#allocation4], 128, 128, 8
    $region9: #{tpu_custom_call.1} parent=1 // pred_fallthru
      _
    // Predicated region
    $region10: #{tpu_custom_call.1} parent=1 // pred_check
      _
    $region11: #{tpu_custom_call.1} parent=1 // pred_check_branch
      %32 = sbr.rel (0) target = $region13
    $region12: #{tpu_custom_call.1} parent=1 // pred_region
      %s34 = ssub.s32 2048, 2048
      %35 = vsyncadd [#allocation7], %s34
      %s36 = sshll.u32 [#allocation6], 4
      %s37 = int_to_ptr.vmem [resolvable:$true] %s36
      %42 = dma.hbm_to_vmem [thread:$0]  %s2, 2048, %s37, [#allocation7], 128, 128, 8
    $region13: #{tpu_custom_call.1} parent=1 // pred_fallthru
      _
    // Predicated region
    $region14: #{tpu_custom_call.1} parent=1 // pred_check
      _
    $region15: #{tpu_custom_call.1} parent=1 // pred_check_branch
      %44 = sbr.rel (0) target = $region17
    $region16: #{tpu_custom_call.1} parent=1 // pred_region
      %s46 = ssub.s32 2048, 2048
      %47 = vsyncadd [#allocation7], %s46
      %s48 = sshll.u32 [#allocation8], 4
      %s49 = int_to_ptr.vmem [resolvable:$true] %s48
      %54 = dma.hbm_to_vmem [thread:$0]  %s3, 2048, %s49, [#allocation7], 128, 128, 8
    $region17: #{tpu_custom_call.1} parent=1 // pred_fallthru
      _
    // Predicated region
    $region18: #{tpu_custom_call.1} parent=1 // pred_check
      _
    $region19: #{tpu_custom_call.1} parent=1 // pred_check_branch
      %56 = sbr.rel (0) target = $region21
    $region20: #{tpu_custom_call.1} parent=1 // pred_region
      _
    $region21: #{tpu_custom_call.1} parent=1 // pred_fallthru
      _
    // Predicated region
    $region22: #{tpu_custom_call.1} parent=1 // pred_check
      _
    $region23: #{tpu_custom_call.1} parent=1 // pred_check_branch
      %58 = sbr.rel (0) target = $region25
    $region24: #{tpu_custom_call.1} parent=1 // pred_region
      %s60 = ssub.s32 2048, 2048
      %61 = vsyncadd [#allocation10], %s60
      %s62 = sshll.u32 [#allocation9], 4
      %s63 = int_to_ptr.vmem [resolvable:$true] %s62
      %68 = dma.hbm_to_vmem [thread:$0]  %s5, 2048, %s63, [#allocation10], 128, 128, 8
    $region25: #{tpu_custom_call.1} parent=1 // pred_fallthru
      _
    // Predicated region
    $region26: #{tpu_custom_call.1} parent=1 // pred_check
      _
    $region27: #{tpu_custom_call.1} parent=1 // pred_check_branch
      %70 = sbr.rel (0) target = $region29
    $region28: #{tpu_custom_call.1} parent=1 // pred_region
      %s72 = ssub.s32 2048, 2048
      %73 = vsyncadd [#allocation10], %s72
      %s74 = sshll.u32 [#allocation11], 4
      %s75 = int_to_ptr.vmem [resolvable:$true] %s74
      %80 = dma.hbm_to_vmem [thread:$0]  %s6, 2048, %s75, [#allocation10], 128, 128, 8
    $region29: #{tpu_custom_call.1} parent=1 // pred_fallthru
      _
    // Predicated region
    $region30: #{tpu_custom_call.1} parent=1 // pred_check
      _
    $region31: #{tpu_custom_call.1} parent=1 // pred_check_branch
      %82 = sbr.rel (0) target = $region33
    $region32: #{tpu_custom_call.1} parent=1 // pred_region
      _
    $region33: #{tpu_custom_call.1} parent=1 // pred_fallthru
      _
    // Predicated region
    $region34: #{tpu_custom_call.1} parent=1 // pred_check
      _
    $region35: #{tpu_custom_call.1} parent=1 // pred_check_branch
      %84 = sbr.rel (0) target = $region37
    $region36: #{tpu_custom_call.1} parent=1 // pred_region
      %85 = dma.done [#allocation4], 2048
    $region37: #{tpu_custom_call.1} parent=1 // pred_fallthru
      _
    // Predicated region
    $region38: #{tpu_custom_call.1} parent=1 // pred_check
      _
    $region39: #{tpu_custom_call.1} parent=1 // pred_check_branch
      %87 = sbr.rel (0) target = $region41
    $region40: #{tpu_custom_call.1} parent=1 // pred_region
      %88 = dma.done [#allocation7], 2048
    $region41: #{tpu_custom_call.1} parent=1 // pred_fallthru
      _
    // Predicated region
    $region42: #{tpu_custom_call.1} parent=1 // pred_check
      _
    $region43: #{tpu_custom_call.1} parent=1 // pred_check_branch
      %90 = sbr.rel (0) target = $region45
    $region44: #{tpu_custom_call.1} parent=1 // pred_region
      %91 = dma.done [#allocation7], 2048
    $region45: #{tpu_custom_call.1} parent=1 // pred_fallthru
      _
    // Predicated region
    $region46: #{tpu_custom_call.1} parent=1 // pred_check
      _
    $region47: #{tpu_custom_call.1} parent=1 // pred_check_branch
      %93 = sbr.rel (0) target = $region49
    $region48: #{tpu_custom_call.1} parent=1 // pred_region
      %94 = dma.done [#allocation10], 2048
    $region49: #{tpu_custom_call.1} parent=1 // pred_fallthru
      _
    // Predicated region
    $region50: #{tpu_custom_call.1} parent=1 // pred_check
      _
    $region51: #{tpu_custom_call.1} parent=1 // pred_check_branch
      %96 = sbr.rel (0) target = $region53
    $region52: #{tpu_custom_call.1} parent=1 // pred_region
      %97 = dma.done [#allocation10], 2048
    $region53: #{tpu_custom_call.1} parent=1 // pred_fallthru
      _
    %v98 = vld [vmem:[%s0] sm:$0xff]
    %v99 = vld [vmem:[%s0 + $0x8] sm:$0xff]
    %v100 = vld [vmem:[%s0 + $0x10] sm:$0xff]
    %v101 = vld [vmem:[%s0 + $0x18] sm:$0xff]
    %v102 = vld [vmem:[%s0 + $0x20] sm:$0xff]
    %v103 = vld [vmem:[%s0 + $0x28] sm:$0xff]
    %v104 = vld [vmem:[%s0 + $0x30] sm:$0xff]
    %v105 = vld [vmem:[%s0 + $0x38] sm:$0xff]
    %v106 = vlaneseq
    %v107 = vand.u32 %v106, 127
    %108 = vset.pattern.permute.xlu0 0
    %109 = vperm.xlu0 %108, %v98
    %v110 = vpop.permute.xlu0 %109
    %111 = vset.pattern.permute.xlu0 0
    %112 = vperm.xlu0 %111, %v99
    %v113 = vpop.permute.xlu0 %112
    %114 = vset.pattern.permute.xlu0 0
    %115 = vperm.xlu0 %114, %v100
    %v116 = vpop.permute.xlu0 %115
    %117 = vset.pattern.permute.xlu0 0
    %118 = vperm.xlu0 %117, %v101
    %v119 = vpop.permute.xlu0 %118
    %120 = vset.pattern.permute.xlu0 0
    %121 = vperm.xlu0 %120, %v102
    %v122 = vpop.permute.xlu0 %121
    %123 = vset.pattern.permute.xlu0 0
    %124 = vperm.xlu0 %123, %v103
    %v125 = vpop.permute.xlu0 %124
    %126 = vset.pattern.permute.xlu0 0
    %127 = vperm.xlu0 %126, %v104
    %v128 = vpop.permute.xlu0 %127
    %129 = vset.pattern.permute.xlu0 0
    %130 = vperm.xlu0 %129, %v105
    %v131 = vpop.permute.xlu0 %130
    %vm132 = vcmp.eq.s32.totalorder %v107, %v110
    %vm133 = vcmp.eq.s32.totalorder %v107, %v113
    %vm134 = vcmp.eq.s32.totalorder %v107, %v116
    %vm135 = vcmp.eq.s32.totalorder %v107, %v119
    %vm136 = vcmp.eq.s32.totalorder %v107, %v122
    %vm137 = vcmp.eq.s32.totalorder %v107, %v125
    %vm138 = vcmp.eq.s32.totalorder %v107, %v128
    %vm139 = vcmp.eq.s32.totalorder %v107, %v131
    %v140 = vsel %vm132, 1, 0
    %v141 = vsel %vm133, 1, 0
    %v142 = vsel %vm134, 1, 0
    %v143 = vsel %vm135, 1, 0
    %v144 = vsel %vm136, 1, 0
    %v145 = vsel %vm137, 1, 0
    %v146 = vsel %vm138, 1, 0
    %v147 = vsel %vm139, 1, 0
    %v148 = vcvt.s32.f32 %v140
    %v149 = vcvt.s32.f32 %v141
    %v150 = vcvt.s32.f32 %v142
    %v151 = vcvt.s32.f32 %v143
    %v152 = vcvt.s32.f32 %v144
    %v153 = vcvt.s32.f32 %v145
    %v154 = vcvt.s32.f32 %v146
    %v155 = vcvt.s32.f32 %v147
    %v156 = vld [vmem:[#allocation3] sm:$0xff]
    %v157 = vld [vmem:[#allocation3 + $0x8] sm:$0xff]
    %v158 = vld [vmem:[#allocation3 + $0x10] sm:$0xff]
    %v159 = vld [vmem:[#allocation3 + $0x18] sm:$0xff]
    %v160 = vld [vmem:[#allocation3 + $0x20] sm:$0xff]
    %v161 = vld [vmem:[#allocation3 + $0x28] sm:$0xff]
    %v162 = vld [vmem:[#allocation3 + $0x30] sm:$0xff]
    %v163 = vld [vmem:[#allocation3 + $0x38] sm:$0xff]
    %v164 = vld [vmem:[#allocation3 + $0x40] sm:$0xff]
    %v165 = vld [vmem:[#allocation3 + $0x48] sm:$0xff]
    %v166 = vld [vmem:[#allocation3 + $0x50] sm:$0xff]
    %v167 = vld [vmem:[#allocation3 + $0x58] sm:$0xff]
    %v168 = vld [vmem:[#allocation3 + $0x60] sm:$0xff]
    %v169 = vld [vmem:[#allocation3 + $0x68] sm:$0xff]
    %v170 = vld [vmem:[#allocation3 + $0x70] sm:$0xff]
    %v171 = vld [vmem:[#allocation3 + $0x78] sm:$0xff]
    %172 = vmatprep.subr.mxu0 0.0
    %173 = vmatpush1.msra.mxu0 %v156
    %174 = vmatprep.subr.mxu0 0.0
    %175 = vmatpush1.msra.mxu0 %v157
    %176 = vmatprep.subr.mxu0 0.0
    %177 = vmatpush1.msra.mxu0 %v158
    %178 = vmatprep.subr.mxu0 0.0
    %179 = vmatpush1.msra.mxu0 %v159
    %180 = vmatprep.subr.mxu0 0.0
    %181 = vmatpush1.msra.mxu0 %v160
    %182 = vmatprep.subr.mxu0 0.0
    %183 = vmatpush1.msra.mxu0 %v161
    %184 = vmatprep.subr.mxu0 0.0
    %185 = vmatpush1.msra.mxu0 %v162
    %186 = vmatprep.subr.mxu0 0.0
    %187 = vmatpush1.msra.mxu0 %v163
    %188 = vmatprep.subr.mxu0 0.0
    %189 = vmatpush1.msra.mxu0 %v164
    %190 = vmatprep.subr.mxu0 0.0
    %191 = vmatpush1.msra.mxu0 %v165
    %192 = vmatprep.subr.mxu0 0.0
    %193 = vmatpush1.msra.mxu0 %v166
    %194 = vmatprep.subr.mxu0 0.0
    %195 = vmatpush1.msra.mxu0 %v167
    %196 = vmatprep.subr.mxu0 0.0
    %197 = vmatpush1.msra.mxu0 %v168
    %198 = vmatprep.subr.mxu0 0.0
    %199 = vmatpush1.msra.mxu0 %v169
    %200 = vmatprep.subr.mxu0 0.0
    %201 = vmatpush1.msra.mxu0 %v170
    %202 = vmatprep.subr.mxu0 0.0
    %203 = vmatpush1.msra.mxu0 %v171
    %204 = vmatprep.subr.mxu0 0.0
    %205 = vmatpush1.msra.mxu0 0.0
    %206 = vmatprep.subr.mxu0 0.0
    %207 = vmatpush1.msra.mxu0 0.0
    %208 = vmatprep.subr.mxu0 0.0
    %209 = vmatpush1.msra.mxu0 0.0
    %210 = vmatprep.subr.mxu0 0.0
    %211 = vmatpush1.msra.mxu0 0.0
    %212 = vmatprep.subr.mxu0 0.0
    %213 = vmatpush1.msra.mxu0 0.0
    %214 = vmatprep.subr.mxu0 0.0
    %215 = vmatpush1.msra.mxu0 0.0
    %216 = vmatprep.subr.mxu0 0.0
    %217 = vmatpush1.msra.mxu0 0.0
    %218 = vmatprep.subr.mxu0 0.0
    %219 = vmatpush1.msra.mxu0 0.0
    %220 = vmatprep.subr.mxu0 0.0
    %221 = vmatpush1.msra.mxu0 0.0
    %222 = vmatprep.subr.mxu0 0.0
    %223 = vmatpush1.msra.mxu0 0.0
    %224 = vmatprep.subr.mxu0 0.0
    %225 = vmatpush1.msra.mxu0 0.0
    %226 = vmatprep.subr.mxu0 0.0
    %227 = vmatpush1.msra.mxu0 0.0
    %228 = vmatprep.subr.mxu0 0.0
    %229 = vmatpush1.msra.mxu0 0.0
    %230 = vmatprep.subr.mxu0 0.0
    %231 = vmatpush1.msra.mxu0 0.0
    %232 = vmatprep.subr.mxu0 0.0
    %233 = vmatpush1.msra.mxu0 0.0
    %234 = vmatprep.subr.mxu0 0.0
    %235 = vmatpush1.msra.mxu0 0.0
    %236 = vmatprep.mubr.f32.mxu0 0.0
    %237 = vmatmul.mubr.f32.gmra.mrb[0].mxu0 %v148
    %v238 = vpop.f32.mrb[0].mxu0
    %v239 = vadd.f32 0.0, %v238
    %v240 = vpop.f32.mrb[0].mxu0
    %241 = vmatprep.mubr.f32.mxu0 0.0
    %242 = vmatmul.mubr.f32.gmra.mrb[0].mxu0 %v149
    %v243 = vpop.f32.mrb[0].mxu0
    %v244 = vadd.f32 0.0, %v243
    %v245 = vpop.f32.mrb[0].mxu0
    %246 = vmatprep.mubr.f32.mxu0 0.0
    %247 = vmatmul.mubr.f32.gmra.mrb[0].mxu0 %v150
    %v248 = vpop.f32.mrb[0].mxu0
    %v249 = vadd.f32 0.0, %v248
    %v250 = vpop.f32.mrb[0].mxu0
    %251 = vmatprep.mubr.f32.mxu0 0.0
    %252 = vmatmul.mubr.f32.gmra.mrb[0].mxu0 %v151
    %v253 = vpop.f32.mrb[0].mxu0
    %v254 = vadd.f32 0.0, %v253
    %v255 = vpop.f32.mrb[0].mxu0
    %256 = vmatprep.mubr.f32.mxu0 0.0
    %257 = vmatmul.mubr.f32.gmra.mrb[0].mxu0 %v152
    %v258 = vpop.f32.mrb[0].mxu0
    %v259 = vadd.f32 0.0, %v258
    %v260 = vpop.f32.mrb[0].mxu0
    %261 = vmatprep.mubr.f32.mxu0 0.0
    %262 = vmatmul.mubr.f32.gmra.mrb[0].mxu0 %v153
    %v263 = vpop.f32.mrb[0].mxu0
    %v264 = vadd.f32 0.0, %v263
    %v265 = vpop.f32.mrb[0].mxu0
    %266 = vmatprep.mubr.f32.mxu0 0.0
    %267 = vmatmul.mubr.f32.gmra.mrb[0].mxu0 %v154
    %v268 = vpop.f32.mrb[0].mxu0
    %v269 = vadd.f32 0.0, %v268
    %v270 = vpop.f32.mrb[0].mxu0
    %271 = vmatprep.mubr.f32.mxu0 0.0
    %272 = vmatmul.mubr.f32.gmra.mrb[0].mxu0 %v155
    %v273 = vpop.f32.mrb[0].mxu0
    %v274 = vadd.f32 0.0, %v273
    %v275 = vpop.f32.mrb[0].mxu0
    %276 = vdwg.mxu0
    %v277 = vld [vmem:[#allocation6] sm:$0xff]
    %v278 = vld [vmem:[#allocation6 + $0x8] sm:$0xff]
    %v279 = vld [vmem:[#allocation6 + $0x10] sm:$0xff]
    %v280 = vld [vmem:[#allocation6 + $0x18] sm:$0xff]
    %v281 = vld [vmem:[#allocation6 + $0x20] sm:$0xff]
    %v282 = vld [vmem:[#allocation6 + $0x28] sm:$0xff]
    %v283 = vld [vmem:[#allocation6 + $0x30] sm:$0xff]
    %v284 = vld [vmem:[#allocation6 + $0x38] sm:$0xff]
    %v285 = vld [vmem:[#allocation6 + $0x40] sm:$0xff]
    %v286 = vld [vmem:[#allocation6 + $0x48] sm:$0xff]
    %v287 = vld [vmem:[#allocation6 + $0x50] sm:$0xff]
    %v288 = vld [vmem:[#allocation6 + $0x58] sm:$0xff]
    %v289 = vld [vmem:[#allocation6 + $0x60] sm:$0xff]
    %v290 = vld [vmem:[#allocation6 + $0x68] sm:$0xff]
    %v291 = vld [vmem:[#allocation6 + $0x70] sm:$0xff]
    %v292 = vld [vmem:[#allocation6 + $0x78] sm:$0xff]
    %293 = vmatprep.subr.mxu0 0.0
    %294 = vmatpush1.msra.mxu0 %v277
    %295 = vmatprep.subr.mxu0 0.0
    %296 = vmatpush1.msra.mxu0 %v278
    %297 = vmatprep.subr.mxu0 0.0
    %298 = vmatpush1.msra.mxu0 %v279
    %299 = vmatprep.subr.mxu0 0.0
    %300 = vmatpush1.msra.mxu0 %v280
    %301 = vmatprep.subr.mxu0 0.0
    %302 = vmatpush1.msra.mxu0 %v281
    %303 = vmatprep.subr.mxu0 0.0
    %304 = vmatpush1.msra.mxu0 %v282
    %305 = vmatprep.subr.mxu0 0.0
    %306 = vmatpush1.msra.mxu0 %v283
    %307 = vmatprep.subr.mxu0 0.0
    %308 = vmatpush1.msra.mxu0 %v284
    %309 = vmatprep.subr.mxu0 0.0
    %310 = vmatpush1.msra.mxu0 %v285
    %311 = vmatprep.subr.mxu0 0.0
    %312 = vmatpush1.msra.mxu0 %v286
    %313 = vmatprep.subr.mxu0 0.0
    %314 = vmatpush1.msra.mxu0 %v287
    %315 = vmatprep.subr.mxu0 0.0
    %316 = vmatpush1.msra.mxu0 %v288
    %317 = vmatprep.subr.mxu0 0.0
    %318 = vmatpush1.msra.mxu0 %v289
    %319 = vmatprep.subr.mxu0 0.0
    %320 = vmatpush1.msra.mxu0 %v290
    %321 = vmatprep.subr.mxu0 0.0
    %322 = vmatpush1.msra.mxu0 %v291
    %323 = vmatprep.subr.mxu0 0.0
    %324 = vmatpush1.msra.mxu0 %v292
    %325 = vmatprep.subr.mxu0 0.0
    %326 = vmatpush1.msra.mxu0 0.0
    %327 = vmatprep.subr.mxu0 0.0
    %328 = vmatpush1.msra.mxu0 0.0
    %329 = vmatprep.subr.mxu0 0.0
    %330 = vmatpush1.msra.mxu0 0.0
    %331 = vmatprep.subr.mxu0 0.0
    %332 = vmatpush1.msra.mxu0 0.0
    %333 = vmatprep.subr.mxu0 0.0
    %334 = vmatpush1.msra.mxu0 0.0
    %335 = vmatprep.subr.mxu0 0.0
    %336 = vmatpush1.msra.mxu0 0.0
    %337 = vmatprep.subr.mxu0 0.0
    %338 = vmatpush1.msra.mxu0 0.0
    %339 = vmatprep.subr.mxu0 0.0
    %340 = vmatpush1.msra.mxu0 0.0
    %341 = vmatprep.subr.mxu0 0.0
    %342 = vmatpush1.msra.mxu0 0.0
    %343 = vmatprep.subr.mxu0 0.0
    %344 = vmatpush1.msra.mxu0 0.0
    %345 = vmatprep.subr.mxu0 0.0
    %346 = vmatpush1.msra.mxu0 0.0
    %347 = vmatprep.subr.mxu0 0.0
    %348 = vmatpush1.msra.mxu0 0.0
    %349 = vmatprep.subr.mxu0 0.0
    %350 = vmatpush1.msra.mxu0 0.0
    %351 = vmatprep.subr.mxu0 0.0
    %352 = vmatpush1.msra.mxu0 0.0
    %353 = vmatprep.subr.mxu0 0.0
    %354 = vmatpush1.msra.mxu0 0.0
    %355 = vmatprep.subr.mxu0 0.0
    %356 = vmatpush1.msra.mxu0 0.0
    %357 = vmatprep.mubr.f32.mxu0 0.0
    %358 = vmatmul.mubr.f32.gmra.mrb[0].mxu0 0.0
    %v359 = vpop.f32.mrb[0].mxu0
    %v360 = vadd.f32 0.0, %v359
    %v361 = vpop.f32.mrb[0].mxu0
    %362 = vdwg.mxu0
    %v363 = vadd.f32 %v239, %v360
    %v364 = vtanh.pop %v363
    %365 = vst [vmem:[#allocation2] sm:$0xff] %v364
    %366 = vmatprep.subr.mxu0 0.0
    %367 = vmatpush1.msra.mxu0 %v277
    %368 = vmatprep.subr.mxu0 0.0
    %369 = vmatpush1.msra.mxu0 %v278
    %370 = vmatprep.subr.mxu0 0.0
    %371 = vmatpush1.msra.mxu0 %v279
    %372 = vmatprep.subr.mxu0 0.0
    %373 = vmatpush1.msra.mxu0 %v280
    %374 = vmatprep.subr.mxu0 0.0
    %375 = vmatpush1.msra.mxu0 %v281
    %376 = vmatprep.subr.mxu0 0.0
    %377 = vmatpush1.msra.mxu0 %v282
    %378 = vmatprep.subr.mxu0 0.0
    %379 = vmatpush1.msra.mxu0 %v283
    %380 = vmatprep.subr.mxu0 0.0
    %381 = vmatpush1.msra.mxu0 %v284
    %382 = vmatprep.subr.mxu0 0.0
    %383 = vmatpush1.msra.mxu0 %v285
    %384 = vmatprep.subr.mxu0 0.0
    %385 = vmatpush1.msra.mxu0 %v286
    %386 = vmatprep.subr.mxu0 0.0
    %387 = vmatpush1.msra.mxu0 %v287
    %388 = vmatprep.subr.mxu0 0.0
    %389 = vmatpush1.msra.mxu0 %v288
    %390 = vmatprep.subr.mxu0 0.0
    %391 = vmatpush1.msra.mxu0 %v289
    %392 = vmatprep.subr.mxu0 0.0
    %393 = vmatpush1.msra.mxu0 %v290
    %394 = vmatprep.subr.mxu0 0.0
    %395 = vmatpush1.msra.mxu0 %v291
    %396 = vmatprep.subr.mxu0 0.0
    %397 = vmatpush1.msra.mxu0 %v292
    %398 = vmatprep.subr.mxu0 0.0
    %399 = vmatpush1.msra.mxu0 0.0
    %400 = vmatprep.subr.mxu0 0.0
    %401 = vmatpush1.msra.mxu0 0.0
    %402 = vmatprep.subr.mxu0 0.0
    %403 = vmatpush1.msra.mxu0 0.0
    %404 = vmatprep.subr.mxu0 0.0
    %405 = vmatpush1.msra.mxu0 0.0
    %406 = vmatprep.subr.mxu0 0.0
    %407 = vmatpush1.msra.mxu0 0.0
    %408 = vmatprep.subr.mxu0 0.0
    %409 = vmatpush1.msra.mxu0 0.0
    %410 = vmatprep.subr.mxu0 0.0
    %411 = vmatpush1.msra.mxu0 0.0
    %412 = vmatprep.subr.mxu0 0.0
    %413 = vmatpush1.msra.mxu0 0.0
    %414 = vmatprep.subr.mxu0 0.0
    %415 = vmatpush1.msra.mxu0 0.0
    %416 = vmatprep.subr.mxu0 0.0
    %417 = vmatpush1.msra.mxu0 0.0
    %418 = vmatprep.subr.mxu0 0.0
    %419 = vmatpush1.msra.mxu0 0.0
    %420 = vmatprep.subr.mxu0 0.0
    %421 = vmatpush1.msra.mxu0 0.0
    %422 = vmatprep.subr.mxu0 0.0
    %423 = vmatpush1.msra.mxu0 0.0
    %424 = vmatprep.subr.mxu0 0.0
    %425 = vmatpush1.msra.mxu0 0.0
    %426 = vmatprep.subr.mxu0 0.0
    %427 = vmatpush1.msra.mxu0 0.0
    %428 = vmatprep.subr.mxu0 0.0
    %429 = vmatpush1.msra.mxu0 0.0
    %430 = vmatprep.mubr.f32.mxu0 0.0
    %431 = vmatmul.mubr.f32.gmra.mrb[0].mxu0 %v364
    %v432 = vpop.f32.mrb[0].mxu0
    %v433 = vadd.f32 0.0, %v432
    %v434 = vpop.f32.mrb[0].mxu0
    %435 = vdwg.mxu0
    %v436 = vadd.f32 %v244, %v433
    %v437 = vtanh.pop %v436
    %438 = vst [vmem:[#allocation2 + $0x8] sm:$0xff] %v437
    %439 = vmatprep.subr.mxu0 0.0
    %440 = vmatpush1.msra.mxu0 %v277
    %441 = vmatprep.subr.mxu0 0.0
    %442 = vmatpush1.msra.mxu0 %v278
    %443 = vmatprep.subr.mxu0 0.0
    %444 = vmatpush1.msra.mxu0 %v279
    %445 = vmatprep.subr.mxu0 0.0
    %446 = vmatpush1.msra.mxu0 %v280
    %447 = vmatprep.subr.mxu0 0.0
    %448 = vmatpush1.msra.mxu0 %v281
    %449 = vmatprep.subr.mxu0 0.0
    %450 = vmatpush1.msra.mxu0 %v282
    %451 = vmatprep.subr.mxu0 0.0
    %452 = vmatpush1.msra.mxu0 %v283
    %453 = vmatprep.subr.mxu0 0.0
    %454 = vmatpush1.msra.mxu0 %v284
    %455 = vmatprep.subr.mxu0 0.0
    %456 = vmatpush1.msra.mxu0 %v285
    %457 = vmatprep.subr.mxu0 0.0
    %458 = vmatpush1.msra.mxu0 %v286
    %459 = vmatprep.subr.mxu0 0.0
    %460 = vmatpush1.msra.mxu0 %v287
    %461 = vmatprep.subr.mxu0 0.0
    %462 = vmatpush1.msra.mxu0 %v288
    %463 = vmatprep.subr.mxu0 0.0
    %464 = vmatpush1.msra.mxu0 %v289
    %465 = vmatprep.subr.mxu0 0.0
    %466 = vmatpush1.msra.mxu0 %v290
    %467 = vmatprep.subr.mxu0 0.0
    %468 = vmatpush1.msra.mxu0 %v291
    %469 = vmatprep.subr.mxu0 0.0
    %470 = vmatpush1.msra.mxu0 %v292
    %471 = vmatprep.subr.mxu0 0.0
    %472 = vmatpush1.msra.mxu0 0.0
    %473 = vmatprep.subr.mxu0 0.0
    %474 = vmatpush1.msra.mxu0 0.0
    %475 = vmatprep.subr.mxu0 0.0
    %476 = vmatpush1.msra.mxu0 0.0
    %477 = vmatprep.subr.mxu0 0.0
    %478 = vmatpush1.msra.mxu0 0.0
    %479 = vmatprep.subr.mxu0 0.0
    %480 = vmatpush1.msra.mxu0 0.0
    %481 = vmatprep.subr.mxu0 0.0
    %482 = vmatpush1.msra.mxu0 0.0
    %483 = vmatprep.subr.mxu0 0.0
    %484 = vmatpush1.msra.mxu0 0.0
    %485 = vmatprep.subr.mxu0 0.0
    %486 = vmatpush1.msra.mxu0 0.0
    %487 = vmatprep.subr.mxu0 0.0
    %488 = vmatpush1.msra.mxu0 0.0
    %489 = vmatprep.subr.mxu0 0.0
    %490 = vmatpush1.msra.mxu0 0.0
    %491 = vmatprep.subr.mxu0 0.0
    %492 = vmatpush1.msra.mxu0 0.0
    %493 = vmatprep.subr.mxu0 0.0
    %494 = vmatpush1.msra.mxu0 0.0
    %495 = vmatprep.subr.mxu0 0.0
    %496 = vmatpush1.msra.mxu0 0.0
    %497 = vmatprep.subr.mxu0 0.0
    %498 = vmatpush1.msra.mxu0 0.0
    %499 = vmatprep.subr.mxu0 0.0
    %500 = vmatpush1.msra.mxu0 0.0
    %501 = vmatprep.subr.mxu0 0.0
    %502 = vmatpush1.msra.mxu0 0.0
    %503 = vmatprep.mubr.f32.mxu0 0.0
    %504 = vmatmul.mubr.f32.gmra.mrb[0].mxu0 %v437
    %v505 = vpop.f32.mrb[0].mxu0
    %v506 = vadd.f32 0.0, %v505
    %v507 = vpop.f32.mrb[0].mxu0
    %508 = vdwg.mxu0
    %v509 = vadd.f32 %v249, %v506
    %v510 = vtanh.pop %v509
    %511 = vst [vmem:[#allocation2 + $0x10] sm:$0xff] %v510
    %512 = vmatprep.subr.mxu0 0.0
    %513 = vmatpush1.msra.mxu0 %v277
    %514 = vmatprep.subr.mxu0 0.0
    %515 = vmatpush1.msra.mxu0 %v278
    %516 = vmatprep.subr.mxu0 0.0
    %517 = vmatpush1.msra.mxu0 %v279
    %518 = vmatprep.subr.mxu0 0.0
    %519 = vmatpush1.msra.mxu0 %v280
    %520 = vmatprep.subr.mxu0 0.0
    %521 = vmatpush1.msra.mxu0 %v281
    %522 = vmatprep.subr.mxu0 0.0
    %523 = vmatpush1.msra.mxu0 %v282
    %524 = vmatprep.subr.mxu0 0.0
    %525 = vmatpush1.msra.mxu0 %v283
    %526 = vmatprep.subr.mxu0 0.0
    %527 = vmatpush1.msra.mxu0 %v284
    %528 = vmatprep.subr.mxu0 0.0
    %529 = vmatpush1.msra.mxu0 %v285
    %530 = vmatprep.subr.mxu0 0.0
    %531 = vmatpush1.msra.mxu0 %v286
    %532 = vmatprep.subr.mxu0 0.0
    %533 = vmatpush1.msra.mxu0 %v287
    %534 = vmatprep.subr.mxu0 0.0
    %535 = vmatpush1.msra.mxu0 %v288
    %536 = vmatprep.subr.mxu0 0.0
    %537 = vmatpush1.msra.mxu0 %v289
    %538 = vmatprep.subr.mxu0 0.0
    %539 = vmatpush1.msra.mxu0 %v290
    %540 = vmatprep.subr.mxu0 0.0
    %541 = vmatpush1.msra.mxu0 %v291
    %542 = vmatprep.subr.mxu0 0.0
    %543 = vmatpush1.msra.mxu0 %v292
    %544 = vmatprep.subr.mxu0 0.0
    %545 = vmatpush1.msra.mxu0 0.0
    %546 = vmatprep.subr.mxu0 0.0
    %547 = vmatpush1.msra.mxu0 0.0
    %548 = vmatprep.subr.mxu0 0.0
    %549 = vmatpush1.msra.mxu0 0.0
    %550 = vmatprep.subr.mxu0 0.0
    %551 = vmatpush1.msra.mxu0 0.0
    %552 = vmatprep.subr.mxu0 0.0
    %553 = vmatpush1.msra.mxu0 0.0
    %554 = vmatprep.subr.mxu0 0.0
    %555 = vmatpush1.msra.mxu0 0.0
    %556 = vmatprep.subr.mxu0 0.0
    %557 = vmatpush1.msra.mxu0 0.0
    %558 = vmatprep.subr.mxu0 0.0
    %559 = vmatpush1.msra.mxu0 0.0
    %560 = vmatprep.subr.mxu0 0.0
    %561 = vmatpush1.msra.mxu0 0.0
    %562 = vmatprep.subr.mxu0 0.0
    %563 = vmatpush1.msra.mxu0 0.0
    %564 = vmatprep.subr.mxu0 0.0
    %565 = vmatpush1.msra.mxu0 0.0
    %566 = vmatprep.subr.mxu0 0.0
    %567 = vmatpush1.msra.mxu0 0.0
    %568 = vmatprep.subr.mxu0 0.0
    %569 = vmatpush1.msra.mxu0 0.0
    %570 = vmatprep.subr.mxu0 0.0
    %571 = vmatpush1.msra.mxu0 0.0
    %572 = vmatprep.subr.mxu0 0.0
    %573 = vmatpush1.msra.mxu0 0.0
    %574 = vmatprep.subr.mxu0 0.0
    %575 = vmatpush1.msra.mxu0 0.0
    %576 = vmatprep.mubr.f32.mxu0 0.0
    %577 = vmatmul.mubr.f32.gmra.mrb[0].mxu0 %v510
    %v578 = vpop.f32.mrb[0].mxu0
    %v579 = vadd.f32 0.0, %v578
    %v580 = vpop.f32.mrb[0].mxu0
    %581 = vdwg.mxu0
    %v582 = vadd.f32 %v254, %v579
    %v583 = vtanh.pop %v582
    %584 = vst [vmem:[#allocation2 + $0x18] sm:$0xff] %v583
    %585 = vmatprep.subr.mxu0 0.0
    %586 = vmatpush1.msra.mxu0 %v277
    %587 = vmatprep.subr.mxu0 0.0
    %588 = vmatpush1.msra.mxu0 %v278
    %589 = vmatprep.subr.mxu0 0.0
    %590 = vmatpush1.msra.mxu0 %v279
    %591 = vmatprep.subr.mxu0 0.0
    %592 = vmatpush1.msra.mxu0 %v280
    %593 = vmatprep.subr.mxu0 0.0
    %594 = vmatpush1.msra.mxu0 %v281
    %595 = vmatprep.subr.mxu0 0.0
    %596 = vmatpush1.msra.mxu0 %v282
    %597 = vmatprep.subr.mxu0 0.0
    %598 = vmatpush1.msra.mxu0 %v283
    %599 = vmatprep.subr.mxu0 0.0
    %600 = vmatpush1.msra.mxu0 %v284
    %601 = vmatprep.subr.mxu0 0.0
    %602 = vmatpush1.msra.mxu0 %v285
    %603 = vmatprep.subr.mxu0 0.0
    %604 = vmatpush1.msra.mxu0 %v286
    %605 = vmatprep.subr.mxu0 0.0
    %606 = vmatpush1.msra.mxu0 %v287
    %607 = vmatprep.subr.mxu0 0.0
    %608 = vmatpush1.msra.mxu0 %v288
    %609 = vmatprep.subr.mxu0 0.0
    %610 = vmatpush1.msra.mxu0 %v289
    %611 = vmatprep.subr.mxu0 0.0
    %612 = vmatpush1.msra.mxu0 %v290
    %613 = vmatprep.subr.mxu0 0.0
    %614 = vmatpush1.msra.mxu0 %v291
    %615 = vmatprep.subr.mxu0 0.0
    %616 = vmatpush1.msra.mxu0 %v292
    %617 = vmatprep.subr.mxu0 0.0
    %618 = vmatpush1.msra.mxu0 0.0
    %619 = vmatprep.subr.mxu0 0.0
    %620 = vmatpush1.msra.mxu0 0.0
    %621 = vmatprep.subr.mxu0 0.0
    %622 = vmatpush1.msra.mxu0 0.0
    %623 = vmatprep.subr.mxu0 0.0
    %624 = vmatpush1.msra.mxu0 0.0
    %625 = vmatprep.subr.mxu0 0.0
    %626 = vmatpush1.msra.mxu0 0.0
    %627 = vmatprep.subr.mxu0 0.0
    %628 = vmatpush1.msra.mxu0 0.0
    %629 = vmatprep.subr.mxu0 0.0
    %630 = vmatpush1.msra.mxu0 0.0
    %631 = vmatprep.subr.mxu0 0.0
    %632 = vmatpush1.msra.mxu0 0.0
    %633 = vmatprep.subr.mxu0 0.0
    %634 = vmatpush1.msra.mxu0 0.0
    %635 = vmatprep.subr.mxu0 0.0
    %636 = vmatpush1.msra.mxu0 0.0
    %637 = vmatprep.subr.mxu0 0.0
    %638 = vmatpush1.msra.mxu0 0.0
    %639 = vmatprep.subr.mxu0 0.0
    %640 = vmatpush1.msra.mxu0 0.0
    %641 = vmatprep.subr.mxu0 0.0
    %642 = vmatpush1.msra.mxu0 0.0
    %643 = vmatprep.subr.mxu0 0.0
    %644 = vmatpush1.msra.mxu0 0.0
    %645 = vmatprep.subr.mxu0 0.0
    %646 = vmatpush1.msra.mxu0 0.0
    %647 = vmatprep.subr.mxu0 0.0
    %648 = vmatpush1.msra.mxu0 0.0
    %649 = vmatprep.mubr.f32.mxu0 0.0
    %650 = vmatmul.mubr.f32.gmra.mrb[0].mxu0 %v583
    %v651 = vpop.f32.mrb[0].mxu0
    %v652 = vadd.f32 0.0, %v651
    %v653 = vpop.f32.mrb[0].mxu0
    %654 = vdwg.mxu0
    %v655 = vadd.f32 %v259, %v652
    %v656 = vtanh.pop %v655
    %657 = vst [vmem:[#allocation2 + $0x20] sm:$0xff] %v656
    %658 = vmatprep.subr.mxu0 0.0
    %659 = vmatpush1.msra.mxu0 %v277
    %660 = vmatprep.subr.mxu0 0.0
    %661 = vmatpush1.msra.mxu0 %v278
    %662 = vmatprep.subr.mxu0 0.0
    %663 = vmatpush1.msra.mxu0 %v279
    %664 = vmatprep.subr.mxu0 0.0
    %665 = vmatpush1.msra.mxu0 %v280
    %666 = vmatprep.subr.mxu0 0.0
    %667 = vmatpush1.msra.mxu0 %v281
    %668 = vmatprep.subr.mxu0 0.0
    %669 = vmatpush1.msra.mxu0 %v282
    %670 = vmatprep.subr.mxu0 0.0
    %671 = vmatpush1.msra.mxu0 %v283
    %672 = vmatprep.subr.mxu0 0.0
    %673 = vmatpush1.msra.mxu0 %v284
    %674 = vmatprep.subr.mxu0 0.0
    %675 = vmatpush1.msra.mxu0 %v285
    %676 = vmatprep.subr.mxu0 0.0
    %677 = vmatpush1.msra.mxu0 %v286
    %678 = vmatprep.subr.mxu0 0.0
    %679 = vmatpush1.msra.mxu0 %v287
    %680 = vmatprep.subr.mxu0 0.0
    %681 = vmatpush1.msra.mxu0 %v288
    %682 = vmatprep.subr.mxu0 0.0
    %683 = vmatpush1.msra.mxu0 %v289
    %684 = vmatprep.subr.mxu0 0.0
    %685 = vmatpush1.msra.mxu0 %v290
    %686 = vmatprep.subr.mxu0 0.0
    %687 = vmatpush1.msra.mxu0 %v291
    %688 = vmatprep.subr.mxu0 0.0
    %689 = vmatpush1.msra.mxu0 %v292
    %690 = vmatprep.subr.mxu0 0.0
    %691 = vmatpush1.msra.mxu0 0.0
    %692 = vmatprep.subr.mxu0 0.0
    %693 = vmatpush1.msra.mxu0 0.0
    %694 = vmatprep.subr.mxu0 0.0
    %695 = vmatpush1.msra.mxu0 0.0
    %696 = vmatprep.subr.mxu0 0.0
    %697 = vmatpush1.msra.mxu0 0.0
    %698 = vmatprep.subr.mxu0 0.0
    %699 = vmatpush1.msra.mxu0 0.0
    %700 = vmatprep.subr.mxu0 0.0
    %701 = vmatpush1.msra.mxu0 0.0
    %702 = vmatprep.subr.mxu0 0.0
    %703 = vmatpush1.msra.mxu0 0.0
    %704 = vmatprep.subr.mxu0 0.0
    %705 = vmatpush1.msra.mxu0 0.0
    %706 = vmatprep.subr.mxu0 0.0
    %707 = vmatpush1.msra.mxu0 0.0
    %708 = vmatprep.subr.mxu0 0.0
    %709 = vmatpush1.msra.mxu0 0.0
    %710 = vmatprep.subr.mxu0 0.0
    %711 = vmatpush1.msra.mxu0 0.0
    %712 = vmatprep.subr.mxu0 0.0
    %713 = vmatpush1.msra.mxu0 0.0
    %714 = vmatprep.subr.mxu0 0.0
    %715 = vmatpush1.msra.mxu0 0.0
    %716 = vmatprep.subr.mxu0 0.0
    %717 = vmatpush1.msra.mxu0 0.0
    %718 = vmatprep.subr.mxu0 0.0
    %719 = vmatpush1.msra.mxu0 0.0
    %720 = vmatprep.subr.mxu0 0.0
    %721 = vmatpush1.msra.mxu0 0.0
    %722 = vmatprep.mubr.f32.mxu0 0.0
    %723 = vmatmul.mubr.f32.gmra.mrb[0].mxu0 %v656
    %v724 = vpop.f32.mrb[0].mxu0
    %v725 = vadd.f32 0.0, %v724
    %v726 = vpop.f32.mrb[0].mxu0
    %727 = vdwg.mxu0
    %v728 = vadd.f32 %v264, %v725
    %v729 = vtanh.pop %v728
    %730 = vst [vmem:[#allocation2 + $0x28] sm:$0xff] %v729
    %731 = vmatprep.subr.mxu0 0.0
    %732 = vmatpush1.msra.mxu0 %v277
    %733 = vmatprep.subr.mxu0 0.0
    %734 = vmatpush1.msra.mxu0 %v278
    %735 = vmatprep.subr.mxu0 0.0
    %736 = vmatpush1.msra.mxu0 %v279
    %737 = vmatprep.subr.mxu0 0.0
    %738 = vmatpush1.msra.mxu0 %v280
    %739 = vmatprep.subr.mxu0 0.0
    %740 = vmatpush1.msra.mxu0 %v281
    %741 = vmatprep.subr.mxu0 0.0
    %742 = vmatpush1.msra.mxu0 %v282
    %743 = vmatprep.subr.mxu0 0.0
    %744 = vmatpush1.msra.mxu0 %v283
    %745 = vmatprep.subr.mxu0 0.0
    %746 = vmatpush1.msra.mxu0 %v284
    %747 = vmatprep.subr.mxu0 0.0
    %748 = vmatpush1.msra.mxu0 %v285
    %749 = vmatprep.subr.mxu0 0.0
    %750 = vmatpush1.msra.mxu0 %v286
    %751 = vmatprep.subr.mxu0 0.0
    %752 = vmatpush1.msra.mxu0 %v287
    %753 = vmatprep.subr.mxu0 0.0
    %754 = vmatpush1.msra.mxu0 %v288
    %755 = vmatprep.subr.mxu0 0.0
    %756 = vmatpush1.msra.mxu0 %v289
    %757 = vmatprep.subr.mxu0 0.0
    %758 = vmatpush1.msra.mxu0 %v290
    %759 = vmatprep.subr.mxu0 0.0
    %760 = vmatpush1.msra.mxu0 %v291
    %761 = vmatprep.subr.mxu0 0.0
    %762 = vmatpush1.msra.mxu0 %v292
    %763 = vmatprep.subr.mxu0 0.0
    %764 = vmatpush1.msra.mxu0 0.0
    %765 = vmatprep.subr.mxu0 0.0
    %766 = vmatpush1.msra.mxu0 0.0
    %767 = vmatprep.subr.mxu0 0.0
    %768 = vmatpush1.msra.mxu0 0.0
    %769 = vmatprep.subr.mxu0 0.0
    %770 = vmatpush1.msra.mxu0 0.0
    %771 = vmatprep.subr.mxu0 0.0
    %772 = vmatpush1.msra.mxu0 0.0
    %773 = vmatprep.subr.mxu0 0.0
    %774 = vmatpush1.msra.mxu0 0.0
    %775 = vmatprep.subr.mxu0 0.0
    %776 = vmatpush1.msra.mxu0 0.0
    %777 = vmatprep.subr.mxu0 0.0
    %778 = vmatpush1.msra.mxu0 0.0
    %779 = vmatprep.subr.mxu0 0.0
    %780 = vmatpush1.msra.mxu0 0.0
    %781 = vmatprep.subr.mxu0 0.0
    %782 = vmatpush1.msra.mxu0 0.0
    %783 = vmatprep.subr.mxu0 0.0
    %784 = vmatpush1.msra.mxu0 0.0
    %785 = vmatprep.subr.mxu0 0.0
    %786 = vmatpush1.msra.mxu0 0.0
    %787 = vmatprep.subr.mxu0 0.0
    %788 = vmatpush1.msra.mxu0 0.0
    %789 = vmatprep.subr.mxu0 0.0
    %790 = vmatpush1.msra.mxu0 0.0
    %791 = vmatprep.subr.mxu0 0.0
    %792 = vmatpush1.msra.mxu0 0.0
    %793 = vmatprep.subr.mxu0 0.0
    %794 = vmatpush1.msra.mxu0 0.0
    %795 = vmatprep.mubr.f32.mxu0 0.0
    %796 = vmatmul.mubr.f32.gmra.mrb[0].mxu0 %v729
    %v797 = vpop.f32.mrb[0].mxu0
    %v798 = vadd.f32 0.0, %v797
    %v799 = vpop.f32.mrb[0].mxu0
    %800 = vdwg.mxu0
    %v801 = vadd.f32 %v269, %v798
    %v802 = vtanh.pop %v801
    %803 = vst [vmem:[#allocation2 + $0x30] sm:$0xff] %v802
    %804 = vmatprep.subr.mxu0 0.0
    %805 = vmatpush1.msra.mxu0 %v277
    %806 = vmatprep.subr.mxu0 0.0
    %807 = vmatpush1.msra.mxu0 %v278
    %808 = vmatprep.subr.mxu0 0.0
    %809 = vmatpush1.msra.mxu0 %v279
    %810 = vmatprep.subr.mxu0 0.0
    %811 = vmatpush1.msra.mxu0 %v280
    %812 = vmatprep.subr.mxu0 0.0
    %813 = vmatpush1.msra.mxu0 %v281
    %814 = vmatprep.subr.mxu0 0.0
    %815 = vmatpush1.msra.mxu0 %v282
    %816 = vmatprep.subr.mxu0 0.0
    %817 = vmatpush1.msra.mxu0 %v283
    %818 = vmatprep.subr.mxu0 0.0
    %819 = vmatpush1.msra.mxu0 %v284
    %820 = vmatprep.subr.mxu0 0.0
    %821 = vmatpush1.msra.mxu0 %v285
    %822 = vmatprep.subr.mxu0 0.0
    %823 = vmatpush1.msra.mxu0 %v286
    %824 = vmatprep.subr.mxu0 0.0
    %825 = vmatpush1.msra.mxu0 %v287
    %826 = vmatprep.subr.mxu0 0.0
    %827 = vmatpush1.msra.mxu0 %v288
    %828 = vmatprep.subr.mxu0 0.0
    %829 = vmatpush1.msra.mxu0 %v289
    %830 = vmatprep.subr.mxu0 0.0
    %831 = vmatpush1.msra.mxu0 %v290
    %832 = vmatprep.subr.mxu0 0.0
    %833 = vmatpush1.msra.mxu0 %v291
    %834 = vmatprep.subr.mxu0 0.0
    %835 = vmatpush1.msra.mxu0 %v292
    %836 = vmatprep.subr.mxu0 0.0
    %837 = vmatpush1.msra.mxu0 0.0
    %838 = vmatprep.subr.mxu0 0.0
    %839 = vmatpush1.msra.mxu0 0.0
    %840 = vmatprep.subr.mxu0 0.0
    %841 = vmatpush1.msra.mxu0 0.0
    %842 = vmatprep.subr.mxu0 0.0
    %843 = vmatpush1.msra.mxu0 0.0
    %844 = vmatprep.subr.mxu0 0.0
    %845 = vmatpush1.msra.mxu0 0.0
    %846 = vmatprep.subr.mxu0 0.0
    %847 = vmatpush1.msra.mxu0 0.0
    %848 = vmatprep.subr.mxu0 0.0
    %849 = vmatpush1.msra.mxu0 0.0
    %850 = vmatprep.subr.mxu0 0.0
    %851 = vmatpush1.msra.mxu0 0.0
    %852 = vmatprep.subr.mxu0 0.0
    %853 = vmatpush1.msra.mxu0 0.0
    %854 = vmatprep.subr.mxu0 0.0
    %855 = vmatpush1.msra.mxu0 0.0
    %856 = vmatprep.subr.mxu0 0.0
    %857 = vmatpush1.msra.mxu0 0.0
    %858 = vmatprep.subr.mxu0 0.0
    %859 = vmatpush1.msra.mxu0 0.0
    %860 = vmatprep.subr.mxu0 0.0
    %861 = vmatpush1.msra.mxu0 0.0
    %862 = vmatprep.subr.mxu0 0.0
    %863 = vmatpush1.msra.mxu0 0.0
    %864 = vmatprep.subr.mxu0 0.0
    %865 = vmatpush1.msra.mxu0 0.0
    %866 = vmatprep.subr.mxu0 0.0
    %867 = vmatpush1.msra.mxu0 0.0
    %868 = vmatprep.mubr.f32.mxu0 0.0
    %869 = vmatmul.mubr.f32.gmra.mrb[0].mxu0 %v802
    %v870 = vpop.f32.mrb[0].mxu0
    %v871 = vadd.f32 0.0, %v870
    %v872 = vpop.f32.mrb[0].mxu0
    %873 = vdwg.mxu0
    %v874 = vadd.f32 %v274, %v871
    %v875 = vtanh.pop %v874
    %876 = vst [vmem:[#allocation2 + $0x38] sm:$0xff] %v875
    %v877 = vld [vmem:[#allocation2] sm:$0xff]
    %v878 = vld [vmem:[#allocation2 + $0x8] sm:$0xff]
    %v879 = vld [vmem:[#allocation2 + $0x10] sm:$0xff]
    %v880 = vld [vmem:[#allocation2 + $0x18] sm:$0xff]
    %v881 = vld [vmem:[#allocation2 + $0x20] sm:$0xff]
    %v882 = vld [vmem:[#allocation2 + $0x28] sm:$0xff]
    %v883 = vld [vmem:[#allocation2 + $0x30] sm:$0xff]
    %v884 = vld [vmem:[#allocation2 + $0x38] sm:$0xff]
    %v885 = vld [vmem:[#allocation8] sm:$0xff]
    %v886 = vld [vmem:[#allocation8 + $0x8] sm:$0xff]
    %v887 = vld [vmem:[#allocation8 + $0x10] sm:$0xff]
    %v888 = vld [vmem:[#allocation8 + $0x18] sm:$0xff]
    %v889 = vld [vmem:[#allocation8 + $0x20] sm:$0xff]
    %v890 = vld [vmem:[#allocation8 + $0x28] sm:$0xff]
    %v891 = vld [vmem:[#allocation8 + $0x30] sm:$0xff]
    %v892 = vld [vmem:[#allocation8 + $0x38] sm:$0xff]
    %v893 = vld [vmem:[#allocation8 + $0x40] sm:$0xff]
    %v894 = vld [vmem:[#allocation8 + $0x48] sm:$0xff]
    %v895 = vld [vmem:[#allocation8 + $0x50] sm:$0xff]
    %v896 = vld [vmem:[#allocation8 + $0x58] sm:$0xff]
    %v897 = vld [vmem:[#allocation8 + $0x60] sm:$0xff]
    %v898 = vld [vmem:[#allocation8 + $0x68] sm:$0xff]
    %v899 = vld [vmem:[#allocation8 + $0x70] sm:$0xff]
    %v900 = vld [vmem:[#allocation8 + $0x78] sm:$0xff]
    %v901 = vld [vmem:[%s4] sm:$0x1]
    %v903 = vlaneseq
    %v904 = vshrl.u32 %v903, 7
    %v905 = vsub.s32 0, %v904
    %v906 = vrot.slane %v901, %v905
    %908 = vmatprep.subr.mxu0 0.0
    %909 = vmatpush1.msra.mxu0 %v885
    %910 = vmatprep.subr.mxu0 0.0
    %911 = vmatpush1.msra.mxu0 %v886
    %912 = vmatprep.subr.mxu0 0.0
    %913 = vmatpush1.msra.mxu0 %v887
    %914 = vmatprep.subr.mxu0 0.0
    %915 = vmatpush1.msra.mxu0 %v888
    %916 = vmatprep.subr.mxu0 0.0
    %917 = vmatpush1.msra.mxu0 %v889
    %918 = vmatprep.subr.mxu0 0.0
    %919 = vmatpush1.msra.mxu0 %v890
    %920 = vmatprep.subr.mxu0 0.0
    %921 = vmatpush1.msra.mxu0 %v891
    %922 = vmatprep.subr.mxu0 0.0
    %923 = vmatpush1.msra.mxu0 %v892
    %924 = vmatprep.subr.mxu0 0.0
    %925 = vmatpush1.msra.mxu0 %v893
    %926 = vmatprep.subr.mxu0 0.0
    %927 = vmatpush1.msra.mxu0 %v894
    %928 = vmatprep.subr.mxu0 0.0
    %929 = vmatpush1.msra.mxu0 %v895
    %930 = vmatprep.subr.mxu0 0.0
    %931 = vmatpush1.msra.mxu0 %v896
    %932 = vmatprep.subr.mxu0 0.0
    %933 = vmatpush1.msra.mxu0 %v897
    %934 = vmatprep.subr.mxu0 0.0
    %935 = vmatpush1.msra.mxu0 %v898
    %936 = vmatprep.subr.mxu0 0.0
    %937 = vmatpush1.msra.mxu0 %v899
    %938 = vmatprep.subr.mxu0 0.0
    %939 = vmatpush1.msra.mxu0 %v900
    %940 = vmatprep.subr.mxu0 0.0
    %941 = vmatpush1.msra.mxu0 0.0
    %942 = vmatprep.subr.mxu0 0.0
    %943 = vmatpush1.msra.mxu0 0.0
    %944 = vmatprep.subr.mxu0 0.0
    %945 = vmatpush1.msra.mxu0 0.0
    %946 = vmatprep.subr.mxu0 0.0
    %947 = vmatpush1.msra.mxu0 0.0
    %948 = vmatprep.subr.mxu0 0.0
    %949 = vmatpush1.msra.mxu0 0.0
    %950 = vmatprep.subr.mxu0 0.0
    %951 = vmatpush1.msra.mxu0 0.0
    %952 = vmatprep.subr.mxu0 0.0
    %953 = vmatpush1.msra.mxu0 0.0
    %954 = vmatprep.subr.mxu0 0.0
    %955 = vmatpush1.msra.mxu0 0.0
    %956 = vmatprep.subr.mxu0 0.0
    %957 = vmatpush1.msra.mxu0 0.0
    %958 = vmatprep.subr.mxu0 0.0
    %959 = vmatpush1.msra.mxu0 0.0
    %960 = vmatprep.subr.mxu0 0.0
    %961 = vmatpush1.msra.mxu0 0.0
    %962 = vmatprep.subr.mxu0 0.0
    %963 = vmatpush1.msra.mxu0 0.0
    %964 = vmatprep.subr.mxu0 0.0
    %965 = vmatpush1.msra.mxu0 0.0
    %966 = vmatprep.subr.mxu0 0.0
    %967 = vmatpush1.msra.mxu0 0.0
    %968 = vmatprep.subr.mxu0 0.0
    %969 = vmatpush1.msra.mxu0 0.0
    %970 = vmatprep.subr.mxu0 0.0
    %971 = vmatpush1.msra.mxu0 0.0
    %972 = vmatprep.mubr.f32.mxu0 0.0
    %973 = vmatmul.mubr.f32.gmra.mrb[0].mxu0 %v877
    %v974 = vpop.f32.mrb[0].mxu0
    %v975 = vadd.f32 %v906, %v974
    %v976 = vpop.f32.mrb[0].mxu0
    %977 = vmatprep.mubr.f32.mxu0 0.0
    %978 = vmatmul.mubr.f32.gmra.mrb[0].mxu0 %v878
    %v979 = vpop.f32.mrb[0].mxu0
    %v980 = vadd.f32 %v906, %v979
    %v981 = vpop.f32.mrb[0].mxu0
    %982 = vmatprep.mubr.f32.mxu0 0.0
    %983 = vmatmul.mubr.f32.gmra.mrb[0].mxu0 %v879
    %v984 = vpop.f32.mrb[0].mxu0
    %v985 = vadd.f32 %v906, %v984
    %v986 = vpop.f32.mrb[0].mxu0
    %987 = vmatprep.mubr.f32.mxu0 0.0
    %988 = vmatmul.mubr.f32.gmra.mrb[0].mxu0 %v880
    %v989 = vpop.f32.mrb[0].mxu0
    %v990 = vadd.f32 %v906, %v989
    %v991 = vpop.f32.mrb[0].mxu0
    %992 = vmatprep.mubr.f32.mxu0 0.0
    %993 = vmatmul.mubr.f32.gmra.mrb[0].mxu0 %v881
    %v994 = vpop.f32.mrb[0].mxu0
    %v995 = vadd.f32 %v906, %v994
    %v996 = vpop.f32.mrb[0].mxu0
    %997 = vmatprep.mubr.f32.mxu0 0.0
    %998 = vmatmul.mubr.f32.gmra.mrb[0].mxu0 %v882
    %v999 = vpop.f32.mrb[0].mxu0
    %v1000 = vadd.f32 %v906, %v999
    %v1001 = vpop.f32.mrb[0].mxu0
    %1002 = vmatprep.mubr.f32.mxu0 0.0
    %1003 = vmatmul.mubr.f32.gmra.mrb[0].mxu0 %v883
    %v1004 = vpop.f32.mrb[0].mxu0
    %v1005 = vadd.f32 %v906, %v1004
    %v1006 = vpop.f32.mrb[0].mxu0
    %1007 = vmatprep.mubr.f32.mxu0 0.0
    %1008 = vmatmul.mubr.f32.gmra.mrb[0].mxu0 %v884
    %v1009 = vpop.f32.mrb[0].mxu0
    %v1010 = vadd.f32 %v906, %v1009
    %v1011 = vpop.f32.mrb[0].mxu0
    %1012 = vdwg.mxu0
    %v1013 = vld [vmem:[#allocation9] sm:$0xff]
    %v1014 = vld [vmem:[#allocation9 + $0x8] sm:$0xff]
    %v1015 = vld [vmem:[#allocation9 + $0x10] sm:$0xff]
    %v1016 = vld [vmem:[#allocation9 + $0x18] sm:$0xff]
    %v1017 = vld [vmem:[#allocation9 + $0x20] sm:$0xff]
    %v1018 = vld [vmem:[#allocation9 + $0x28] sm:$0xff]
    %v1019 = vld [vmem:[#allocation9 + $0x30] sm:$0xff]
    %v1020 = vld [vmem:[#allocation9 + $0x38] sm:$0xff]
    %v1021 = vld [vmem:[#allocation9 + $0x40] sm:$0xff]
    %v1022 = vld [vmem:[#allocation9 + $0x48] sm:$0xff]
    %v1023 = vld [vmem:[#allocation9 + $0x50] sm:$0xff]
    %v1024 = vld [vmem:[#allocation9 + $0x58] sm:$0xff]
    %v1025 = vld [vmem:[#allocation9 + $0x60] sm:$0xff]
    %v1026 = vld [vmem:[#allocation9 + $0x68] sm:$0xff]
    %v1027 = vld [vmem:[#allocation9 + $0x70] sm:$0xff]
    %v1028 = vld [vmem:[#allocation9 + $0x78] sm:$0xff]
    %1029 = vmatprep.subr.mxu0 0.0
    %1030 = vmatpush1.msra.mxu0 %v1013
    %1031 = vmatprep.subr.mxu0 0.0
    %1032 = vmatpush1.msra.mxu0 %v1014
    %1033 = vmatprep.subr.mxu0 0.0
    %1034 = vmatpush1.msra.mxu0 %v1015
    %1035 = vmatprep.subr.mxu0 0.0
    %1036 = vmatpush1.msra.mxu0 %v1016
    %1037 = vmatprep.subr.mxu0 0.0
    %1038 = vmatpush1.msra.mxu0 %v1017
    %1039 = vmatprep.subr.mxu0 0.0
    %1040 = vmatpush1.msra.mxu0 %v1018
    %1041 = vmatprep.subr.mxu0 0.0
    %1042 = vmatpush1.msra.mxu0 %v1019
    %1043 = vmatprep.subr.mxu0 0.0
    %1044 = vmatpush1.msra.mxu0 %v1020
    %1045 = vmatprep.subr.mxu0 0.0
    %1046 = vmatpush1.msra.mxu0 %v1021
    %1047 = vmatprep.subr.mxu0 0.0
    %1048 = vmatpush1.msra.mxu0 %v1022
    %1049 = vmatprep.subr.mxu0 0.0
    %1050 = vmatpush1.msra.mxu0 %v1023
    %1051 = vmatprep.subr.mxu0 0.0
    %1052 = vmatpush1.msra.mxu0 %v1024
    %1053 = vmatprep.subr.mxu0 0.0
    %1054 = vmatpush1.msra.mxu0 %v1025
    %1055 = vmatprep.subr.mxu0 0.0
    %1056 = vmatpush1.msra.mxu0 %v1026
    %1057 = vmatprep.subr.mxu0 0.0
    %1058 = vmatpush1.msra.mxu0 %v1027
    %1059 = vmatprep.subr.mxu0 0.0
    %1060 = vmatpush1.msra.mxu0 %v1028
    %1061 = vmatprep.subr.mxu0 0.0
    %1062 = vmatpush1.msra.mxu0 0.0
    %1063 = vmatprep.subr.mxu0 0.0
    %1064 = vmatpush1.msra.mxu0 0.0
    %1065 = vmatprep.subr.mxu0 0.0
    %1066 = vmatpush1.msra.mxu0 0.0
    %1067 = vmatprep.subr.mxu0 0.0
    %1068 = vmatpush1.msra.mxu0 0.0
    %1069 = vmatprep.subr.mxu0 0.0
    %1070 = vmatpush1.msra.mxu0 0.0
    %1071 = vmatprep.subr.mxu0 0.0
    %1072 = vmatpush1.msra.mxu0 0.0
    %1073 = vmatprep.subr.mxu0 0.0
    %1074 = vmatpush1.msra.mxu0 0.0
    %1075 = vmatprep.subr.mxu0 0.0
    %1076 = vmatpush1.msra.mxu0 0.0
    %1077 = vmatprep.subr.mxu0 0.0
    %1078 = vmatpush1.msra.mxu0 0.0
    %1079 = vmatprep.subr.mxu0 0.0
    %1080 = vmatpush1.msra.mxu0 0.0
    %1081 = vmatprep.subr.mxu0 0.0
    %1082 = vmatpush1.msra.mxu0 0.0
    %1083 = vmatprep.subr.mxu0 0.0
    %1084 = vmatpush1.msra.mxu0 0.0
    %1085 = vmatprep.subr.mxu0 0.0
    %1086 = vmatpush1.msra.mxu0 0.0
    %1087 = vmatprep.subr.mxu0 0.0
    %1088 = vmatpush1.msra.mxu0 0.0
    %1089 = vmatprep.subr.mxu0 0.0
    %1090 = vmatpush1.msra.mxu0 0.0
    %1091 = vmatprep.subr.mxu0 0.0
    %1092 = vmatpush1.msra.mxu0 0.0
    %1093 = vmatprep.mubr.f32.mxu0 0.0
    %1094 = vmatmul.mubr.f32.gmra.mrb[0].mxu0 0.0
    %v1095 = vpop.f32.mrb[0].mxu0
    %v1096 = vadd.f32 0.0, %v1095
    %v1097 = vpop.f32.mrb[0].mxu0
    %1098 = vdwg.mxu0
    %v1099 = vadd.f32 %v975, %v1096
    %v1100 = vtanh.pop %v1099
    %1101 = vst [vmem:[#allocation2] sm:$0xff] %v1100
    %1102 = vmatprep.subr.mxu0 0.0
    %1103 = vmatpush1.msra.mxu0 %v1013
    %1104 = vmatprep.subr.mxu0 0.0
    %1105 = vmatpush1.msra.mxu0 %v1014
    %1106 = vmatprep.subr.mxu0 0.0
    %1107 = vmatpush1.msra.mxu0 %v1015
    %1108 = vmatprep.subr.mxu0 0.0
    %1109 = vmatpush1.msra.mxu0 %v1016
    %1110 = vmatprep.subr.mxu0 0.0
    %1111 = vmatpush1.msra.mxu0 %v1017
    %1112 = vmatprep.subr.mxu0 0.0
    %1113 = vmatpush1.msra.mxu0 %v1018
    %1114 = vmatprep.subr.mxu0 0.0
    %1115 = vmatpush1.msra.mxu0 %v1019
    %1116 = vmatprep.subr.mxu0 0.0
    %1117 = vmatpush1.msra.mxu0 %v1020
    %1118 = vmatprep.subr.mxu0 0.0
    %1119 = vmatpush1.msra.mxu0 %v1021
    %1120 = vmatprep.subr.mxu0 0.0
    %1121 = vmatpush1.msra.mxu0 %v1022
    %1122 = vmatprep.subr.mxu0 0.0
    %1123 = vmatpush1.msra.mxu0 %v1023
    %1124 = vmatprep.subr.mxu0 0.0
    %1125 = vmatpush1.msra.mxu0 %v1024
    %1126 = vmatprep.subr.mxu0 0.0
    %1127 = vmatpush1.msra.mxu0 %v1025
    %1128 = vmatprep.subr.mxu0 0.0
    %1129 = vmatpush1.msra.mxu0 %v1026
    %1130 = vmatprep.subr.mxu0 0.0
    %1131 = vmatpush1.msra.mxu0 %v1027
    %1132 = vmatprep.subr.mxu0 0.0
    %1133 = vmatpush1.msra.mxu0 %v1028
    %1134 = vmatprep.subr.mxu0 0.0
    %1135 = vmatpush1.msra.mxu0 0.0
    %1136 = vmatprep.subr.mxu0 0.0
    %1137 = vmatpush1.msra.mxu0 0.0
    %1138 = vmatprep.subr.mxu0 0.0
    %1139 = vmatpush1.msra.mxu0 0.0
    %1140 = vmatprep.subr.mxu0 0.0
    %1141 = vmatpush1.msra.mxu0 0.0
    %1142 = vmatprep.subr.mxu0 0.0
    %1143 = vmatpush1.msra.mxu0 0.0
    %1144 = vmatprep.subr.mxu0 0.0
    %1145 = vmatpush1.msra.mxu0 0.0
    %1146 = vmatprep.subr.mxu0 0.0
    %1147 = vmatpush1.msra.mxu0 0.0
    %1148 = vmatprep.subr.mxu0 0.0
    %1149 = vmatpush1.msra.mxu0 0.0
    %1150 = vmatprep.subr.mxu0 0.0
    %1151 = vmatpush1.msra.mxu0 0.0
    %1152 = vmatprep.subr.mxu0 0.0
    %1153 = vmatpush1.msra.mxu0 0.0
    %1154 = vmatprep.subr.mxu0 0.0
    %1155 = vmatpush1.msra.mxu0 0.0
    %1156 = vmatprep.subr.mxu0 0.0
    %1157 = vmatpush1.msra.mxu0 0.0
    %1158 = vmatprep.subr.mxu0 0.0
    %1159 = vmatpush1.msra.mxu0 0.0
    %1160 = vmatprep.subr.mxu0 0.0
    %1161 = vmatpush1.msra.mxu0 0.0
    %1162 = vmatprep.subr.mxu0 0.0
    %1163 = vmatpush1.msra.mxu0 0.0
    %1164 = vmatprep.subr.mxu0 0.0
    %1165 = vmatpush1.msra.mxu0 0.0
    %1166 = vmatprep.mubr.f32.mxu0 0.0
    %1167 = vmatmul.mubr.f32.gmra.mrb[0].mxu0 %v1100
    %v1168 = vpop.f32.mrb[0].mxu0
    %v1169 = vadd.f32 0.0, %v1168
    %v1170 = vpop.f32.mrb[0].mxu0
    %1171 = vdwg.mxu0
    %v1172 = vadd.f32 %v980, %v1169
    %v1173 = vtanh.pop %v1172
    %1174 = vst [vmem:[#allocation2 + $0x8] sm:$0xff] %v1173
    %1175 = vmatprep.subr.mxu0 0.0
    %1176 = vmatpush1.msra.mxu0 %v1013
    %1177 = vmatprep.subr.mxu0 0.0
    %1178 = vmatpush1.msra.mxu0 %v1014
    %1179 = vmatprep.subr.mxu0 0.0
    %1180 = vmatpush1.msra.mxu0 %v1015
    %1181 = vmatprep.subr.mxu0 0.0
    %1182 = vmatpush1.msra.mxu0 %v1016
    %1183 = vmatprep.subr.mxu0 0.0
    %1184 = vmatpush1.msra.mxu0 %v1017
    %1185 = vmatprep.subr.mxu0 0.0
    %1186 = vmatpush1.msra.mxu0 %v1018
    %1187 = vmatprep.subr.mxu0 0.0
    %1188 = vmatpush1.msra.mxu0 %v1019
    %1189 = vmatprep.subr.mxu0 0.0
    %1190 = vmatpush1.msra.mxu0 %v1020
    %1191 = vmatprep.subr.mxu0 0.0
    %1192 = vmatpush1.msra.mxu0 %v1021
    %1193 = vmatprep.subr.mxu0 0.0
    %1194 = vmatpush1.msra.mxu0 %v1022
    %1195 = vmatprep.subr.mxu0 0.0
    %1196 = vmatpush1.msra.mxu0 %v1023
    %1197 = vmatprep.subr.mxu0 0.0
    %1198 = vmatpush1.msra.mxu0 %v1024
    %1199 = vmatprep.subr.mxu0 0.0
    %1200 = vmatpush1.msra.mxu0 %v1025
    %1201 = vmatprep.subr.mxu0 0.0
    %1202 = vmatpush1.msra.mxu0 %v1026
    %1203 = vmatprep.subr.mxu0 0.0
    %1204 = vmatpush1.msra.mxu0 %v1027
    %1205 = vmatprep.subr.mxu0 0.0
    %1206 = vmatpush1.msra.mxu0 %v1028
    %1207 = vmatprep.subr.mxu0 0.0
    %1208 = vmatpush1.msra.mxu0 0.0
    %1209 = vmatprep.subr.mxu0 0.0
    %1210 = vmatpush1.msra.mxu0 0.0
    %1211 = vmatprep.subr.mxu0 0.0
    %1212 = vmatpush1.msra.mxu0 0.0
    %1213 = vmatprep.subr.mxu0 0.0
    %1214 = vmatpush1.msra.mxu0 0.0
    %1215 = vmatprep.subr.mxu0 0.0
    %1216 = vmatpush1.msra.mxu0 0.0
    %1217 = vmatprep.subr.mxu0 0.0
    %1218 = vmatpush1.msra.mxu0 0.0
    %1219 = vmatprep.subr.mxu0 0.0
    %1220 = vmatpush1.msra.mxu0 0.0
    %1221 = vmatprep.subr.mxu0 0.0
    %1222 = vmatpush1.msra.mxu0 0.0
    %1223 = vmatprep.subr.mxu0 0.0
    %1224 = vmatpush1.msra.mxu0 0.0
    %1225 = vmatprep.subr.mxu0 0.0
    %1226 = vmatpush1.msra.mxu0 0.0
    %1227 = vmatprep.subr.mxu0 0.0
    %1228 = vmatpush1.msra.mxu0 0.0
    %1229 = vmatprep.subr.mxu0 0.0
    %1230 = vmatpush1.msra.mxu0 0.0
    %1231 = vmatprep.subr.mxu0 0.0
    %1232 = vmatpush1.msra.mxu0 0.0
    %1233 = vmatprep.subr.mxu0 0.0
    %1234 = vmatpush1.msra.mxu0 0.0
    %1235 = vmatprep.subr.mxu0 0.0
    %1236 = vmatpush1.msra.mxu0 0.0
    %1237 = vmatprep.subr.mxu0 0.0
    %1238 = vmatpush1.msra.mxu0 0.0
    %1239 = vmatprep.mubr.f32.mxu0 0.0
    %1240 = vmatmul.mubr.f32.gmra.mrb[0].mxu0 %v1173
    %v1241 = vpop.f32.mrb[0].mxu0
    %v1242 = vadd.f32 0.0, %v1241
    %v1243 = vpop.f32.mrb[0].mxu0
    %1244 = vdwg.mxu0
    %v1245 = vadd.f32 %v985, %v1242
    %v1246 = vtanh.pop %v1245
    %1247 = vst [vmem:[#allocation2 + $0x10] sm:$0xff] %v1246
    %1248 = vmatprep.subr.mxu0 0.0
    %1249 = vmatpush1.msra.mxu0 %v1013
    %1250 = vmatprep.subr.mxu0 0.0
    %1251 = vmatpush1.msra.mxu0 %v1014
    %1252 = vmatprep.subr.mxu0 0.0
    %1253 = vmatpush1.msra.mxu0 %v1015
    %1254 = vmatprep.subr.mxu0 0.0
    %1255 = vmatpush1.msra.mxu0 %v1016
    %1256 = vmatprep.subr.mxu0 0.0
    %1257 = vmatpush1.msra.mxu0 %v1017
    %1258 = vmatprep.subr.mxu0 0.0
    %1259 = vmatpush1.msra.mxu0 %v1018
    %1260 = vmatprep.subr.mxu0 0.0
    %1261 = vmatpush1.msra.mxu0 %v1019
    %1262 = vmatprep.subr.mxu0 0.0
    %1263 = vmatpush1.msra.mxu0 %v1020
    %1264 = vmatprep.subr.mxu0 0.0
    %1265 = vmatpush1.msra.mxu0 %v1021
    %1266 = vmatprep.subr.mxu0 0.0
    %1267 = vmatpush1.msra.mxu0 %v1022
    %1268 = vmatprep.subr.mxu0 0.0
    %1269 = vmatpush1.msra.mxu0 %v1023
    %1270 = vmatprep.subr.mxu0 0.0
    %1271 = vmatpush1.msra.mxu0 %v1024
    %1272 = vmatprep.subr.mxu0 0.0
    %1273 = vmatpush1.msra.mxu0 %v1025
    %1274 = vmatprep.subr.mxu0 0.0
    %1275 = vmatpush1.msra.mxu0 %v1026
    %1276 = vmatprep.subr.mxu0 0.0
    %1277 = vmatpush1.msra.mxu0 %v1027
    %1278 = vmatprep.subr.mxu0 0.0
    %1279 = vmatpush1.msra.mxu0 %v1028
    %1280 = vmatprep.subr.mxu0 0.0
    %1281 = vmatpush1.msra.mxu0 0.0
    %1282 = vmatprep.subr.mxu0 0.0
    %1283 = vmatpush1.msra.mxu0 0.0
    %1284 = vmatprep.subr.mxu0 0.0
    %1285 = vmatpush1.msra.mxu0 0.0
    %1286 = vmatprep.subr.mxu0 0.0
    %1287 = vmatpush1.msra.mxu0 0.0
    %1288 = vmatprep.subr.mxu0 0.0
    %1289 = vmatpush1.msra.mxu0 0.0
    %1290 = vmatprep.subr.mxu0 0.0
    %1291 = vmatpush1.msra.mxu0 0.0
    %1292 = vmatprep.subr.mxu0 0.0
    %1293 = vmatpush1.msra.mxu0 0.0
    %1294 = vmatprep.subr.mxu0 0.0
    %1295 = vmatpush1.msra.mxu0 0.0
    %1296 = vmatprep.subr.mxu0 0.0
    %1297 = vmatpush1.msra.mxu0 0.0
    %1298 = vmatprep.subr.mxu0 0.0
    %1299 = vmatpush1.msra.mxu0 0.0
    %1300 = vmatprep.subr.mxu0 0.0
    %1301 = vmatpush1.msra.mxu0 0.0
    %1302 = vmatprep.subr.mxu0 0.0
    %1303 = vmatpush1.msra.mxu0 0.0
    %1304 = vmatprep.subr.mxu0 0.0
    %1305 = vmatpush1.msra.mxu0 0.0
    %1306 = vmatprep.subr.mxu0 0.0
    %1307 = vmatpush1.msra.mxu0 0.0
    %1308 = vmatprep.subr.mxu0 0.0
    %1309 = vmatpush1.msra.mxu0 0.0
    %1310 = vmatprep.subr.mxu0 0.0
    %1311 = vmatpush1.msra.mxu0 0.0
    %1312 = vmatprep.mubr.f32.mxu0 0.0
    %1313 = vmatmul.mubr.f32.gmra.mrb[0].mxu0 %v1246
    %v1314 = vpop.f32.mrb[0].mxu0
    %v1315 = vadd.f32 0.0, %v1314
    %v1316 = vpop.f32.mrb[0].mxu0
    %1317 = vdwg.mxu0
    %v1318 = vadd.f32 %v990, %v1315
    %v1319 = vtanh.pop %v1318
    %1320 = vst [vmem:[#allocation2 + $0x18] sm:$0xff] %v1319
    %1321 = vmatprep.subr.mxu0 0.0
    %1322 = vmatpush1.msra.mxu0 %v1013
    %1323 = vmatprep.subr.mxu0 0.0
    %1324 = vmatpush1.msra.mxu0 %v1014
    %1325 = vmatprep.subr.mxu0 0.0
    %1326 = vmatpush1.msra.mxu0 %v1015
    %1327 = vmatprep.subr.mxu0 0.0
    %1328 = vmatpush1.msra.mxu0 %v1016
    %1329 = vmatprep.subr.mxu0 0.0
    %1330 = vmatpush1.msra.mxu0 %v1017
    %1331 = vmatprep.subr.mxu0 0.0
    %1332 = vmatpush1.msra.mxu0 %v1018
    %1333 = vmatprep.subr.mxu0 0.0
    %1334 = vmatpush1.msra.mxu0 %v1019
    %1335 = vmatprep.subr.mxu0 0.0
    %1336 = vmatpush1.msra.mxu0 %v1020
    %1337 = vmatprep.subr.mxu0 0.0
    %1338 = vmatpush1.msra.mxu0 %v1021
    %1339 = vmatprep.subr.mxu0 0.0
    %1340 = vmatpush1.msra.mxu0 %v1022
    %1341 = vmatprep.subr.mxu0 0.0
    %1342 = vmatpush1.msra.mxu0 %v1023
    %1343 = vmatprep.subr.mxu0 0.0
    %1344 = vmatpush1.msra.mxu0 %v1024
    %1345 = vmatprep.subr.mxu0 0.0
    %1346 = vmatpush1.msra.mxu0 %v1025
    %1347 = vmatprep.subr.mxu0 0.0
    %1348 = vmatpush1.msra.mxu0 %v1026
    %1349 = vmatprep.subr.mxu0 0.0
    %1350 = vmatpush1.msra.mxu0 %v1027
    %1351 = vmatprep.subr.mxu0 0.0
    %1352 = vmatpush1.msra.mxu0 %v1028
    %1353 = vmatprep.subr.mxu0 0.0
    %1354 = vmatpush1.msra.mxu0 0.0
    %1355 = vmatprep.subr.mxu0 0.0
    %1356 = vmatpush1.msra.mxu0 0.0
    %1357 = vmatprep.subr.mxu0 0.0
    %1358 = vmatpush1.msra.mxu0 0.0
    %1359 = vmatprep.subr.mxu0 0.0
    %1360 = vmatpush1.msra.mxu0 0.0
    %1361 = vmatprep.subr.mxu0 0.0
    %1362 = vmatpush1.msra.mxu0 0.0
    %1363 = vmatprep.subr.mxu0 0.0
    %1364 = vmatpush1.msra.mxu0 0.0
    %1365 = vmatprep.subr.mxu0 0.0
    %1366 = vmatpush1.msra.mxu0 0.0
    %1367 = vmatprep.subr.mxu0 0.0
    %1368 = vmatpush1.msra.mxu0 0.0
    %1369 = vmatprep.subr.mxu0 0.0
    %1370 = vmatpush1.msra.mxu0 0.0
    %1371 = vmatprep.subr.mxu0 0.0
    %1372 = vmatpush1.msra.mxu0 0.0
    %1373 = vmatprep.subr.mxu0 0.0
    %1374 = vmatpush1.msra.mxu0 0.0
    %1375 = vmatprep.subr.mxu0 0.0
    %1376 = vmatpush1.msra.mxu0 0.0
    %1377 = vmatprep.subr.mxu0 0.0
    %1378 = vmatpush1.msra.mxu0 0.0
    %1379 = vmatprep.subr.mxu0 0.0
    %1380 = vmatpush1.msra.mxu0 0.0
    %1381 = vmatprep.subr.mxu0 0.0
    %1382 = vmatpush1.msra.mxu0 0.0
    %1383 = vmatprep.subr.mxu0 0.0
    %1384 = vmatpush1.msra.mxu0 0.0
    %1385 = vmatprep.mubr.f32.mxu0 0.0
    %1386 = vmatmul.mubr.f32.gmra.mrb[0].mxu0 %v1319
    %v1387 = vpop.f32.mrb[0].mxu0
    %v1388 = vadd.f32 0.0, %v1387
    %v1389 = vpop.f32.mrb[0].mxu0
    %1390 = vdwg.mxu0
    %v1391 = vadd.f32 %v995, %v1388
    %v1392 = vtanh.pop %v1391
    %1393 = vst [vmem:[#allocation2 + $0x20] sm:$0xff] %v1392
    %1394 = vmatprep.subr.mxu0 0.0
    %1395 = vmatpush1.msra.mxu0 %v1013
    %1396 = vmatprep.subr.mxu0 0.0
    %1397 = vmatpush1.msra.mxu0 %v1014
    %1398 = vmatprep.subr.mxu0 0.0
    %1399 = vmatpush1.msra.mxu0 %v1015
    %1400 = vmatprep.subr.mxu0 0.0
    %1401 = vmatpush1.msra.mxu0 %v1016
    %1402 = vmatprep.subr.mxu0 0.0
    %1403 = vmatpush1.msra.mxu0 %v1017
    %1404 = vmatprep.subr.mxu0 0.0
    %1405 = vmatpush1.msra.mxu0 %v1018
    %1406 = vmatprep.subr.mxu0 0.0
    %1407 = vmatpush1.msra.mxu0 %v1019
    %1408 = vmatprep.subr.mxu0 0.0
    %1409 = vmatpush1.msra.mxu0 %v1020
    %1410 = vmatprep.subr.mxu0 0.0
    %1411 = vmatpush1.msra.mxu0 %v1021
    %1412 = vmatprep.subr.mxu0 0.0
    %1413 = vmatpush1.msra.mxu0 %v1022
    %1414 = vmatprep.subr.mxu0 0.0
    %1415 = vmatpush1.msra.mxu0 %v1023
    %1416 = vmatprep.subr.mxu0 0.0
    %1417 = vmatpush1.msra.mxu0 %v1024
    %1418 = vmatprep.subr.mxu0 0.0
    %1419 = vmatpush1.msra.mxu0 %v1025
    %1420 = vmatprep.subr.mxu0 0.0
    %1421 = vmatpush1.msra.mxu0 %v1026
    %1422 = vmatprep.subr.mxu0 0.0
    %1423 = vmatpush1.msra.mxu0 %v1027
    %1424 = vmatprep.subr.mxu0 0.0
    %1425 = vmatpush1.msra.mxu0 %v1028
    %1426 = vmatprep.subr.mxu0 0.0
    %1427 = vmatpush1.msra.mxu0 0.0
    %1428 = vmatprep.subr.mxu0 0.0
    %1429 = vmatpush1.msra.mxu0 0.0
    %1430 = vmatprep.subr.mxu0 0.0
    %1431 = vmatpush1.msra.mxu0 0.0
    %1432 = vmatprep.subr.mxu0 0.0
    %1433 = vmatpush1.msra.mxu0 0.0
    %1434 = vmatprep.subr.mxu0 0.0
    %1435 = vmatpush1.msra.mxu0 0.0
    %1436 = vmatprep.subr.mxu0 0.0
    %1437 = vmatpush1.msra.mxu0 0.0
    %1438 = vmatprep.subr.mxu0 0.0
    %1439 = vmatpush1.msra.mxu0 0.0
    %1440 = vmatprep.subr.mxu0 0.0
    %1441 = vmatpush1.msra.mxu0 0.0
    %1442 = vmatprep.subr.mxu0 0.0
    %1443 = vmatpush1.msra.mxu0 0.0
    %1444 = vmatprep.subr.mxu0 0.0
    %1445 = vmatpush1.msra.mxu0 0.0
    %1446 = vmatprep.subr.mxu0 0.0
    %1447 = vmatpush1.msra.mxu0 0.0
    %1448 = vmatprep.subr.mxu0 0.0
    %1449 = vmatpush1.msra.mxu0 0.0
    %1450 = vmatprep.subr.mxu0 0.0
    %1451 = vmatpush1.msra.mxu0 0.0
    %1452 = vmatprep.subr.mxu0 0.0
    %1453 = vmatpush1.msra.mxu0 0.0
    %1454 = vmatprep.subr.mxu0 0.0
    %1455 = vmatpush1.msra.mxu0 0.0
    %1456 = vmatprep.subr.mxu0 0.0
    %1457 = vmatpush1.msra.mxu0 0.0
    %1458 = vmatprep.mubr.f32.mxu0 0.0
    %1459 = vmatmul.mubr.f32.gmra.mrb[0].mxu0 %v1392
    %v1460 = vpop.f32.mrb[0].mxu0
    %v1461 = vadd.f32 0.0, %v1460
    %v1462 = vpop.f32.mrb[0].mxu0
    %1463 = vdwg.mxu0
    %v1464 = vadd.f32 %v1000, %v1461
    %v1465 = vtanh.pop %v1464
    %1466 = vst [vmem:[#allocation2 + $0x28] sm:$0xff] %v1465
    %1467 = vmatprep.subr.mxu0 0.0
    %1468 = vmatpush1.msra.mxu0 %v1013
    %1469 = vmatprep.subr.mxu0 0.0
    %1470 = vmatpush1.msra.mxu0 %v1014
    %1471 = vmatprep.subr.mxu0 0.0
    %1472 = vmatpush1.msra.mxu0 %v1015
    %1473 = vmatprep.subr.mxu0 0.0
    %1474 = vmatpush1.msra.mxu0 %v1016
    %1475 = vmatprep.subr.mxu0 0.0
    %1476 = vmatpush1.msra.mxu0 %v1017
    %1477 = vmatprep.subr.mxu0 0.0
    %1478 = vmatpush1.msra.mxu0 %v1018
    %1479 = vmatprep.subr.mxu0 0.0
    %1480 = vmatpush1.msra.mxu0 %v1019
    %1481 = vmatprep.subr.mxu0 0.0
    %1482 = vmatpush1.msra.mxu0 %v1020
    %1483 = vmatprep.subr.mxu0 0.0
    %1484 = vmatpush1.msra.mxu0 %v1021
    %1485 = vmatprep.subr.mxu0 0.0
    %1486 = vmatpush1.msra.mxu0 %v1022
    %1487 = vmatprep.subr.mxu0 0.0
    %1488 = vmatpush1.msra.mxu0 %v1023
    %1489 = vmatprep.subr.mxu0 0.0
    %1490 = vmatpush1.msra.mxu0 %v1024
    %1491 = vmatprep.subr.mxu0 0.0
    %1492 = vmatpush1.msra.mxu0 %v1025
    %1493 = vmatprep.subr.mxu0 0.0
    %1494 = vmatpush1.msra.mxu0 %v1026
    %1495 = vmatprep.subr.mxu0 0.0
    %1496 = vmatpush1.msra.mxu0 %v1027
    %1497 = vmatprep.subr.mxu0 0.0
    %1498 = vmatpush1.msra.mxu0 %v1028
    %1499 = vmatprep.subr.mxu0 0.0
    %1500 = vmatpush1.msra.mxu0 0.0
    %1501 = vmatprep.subr.mxu0 0.0
    %1502 = vmatpush1.msra.mxu0 0.0
    %1503 = vmatprep.subr.mxu0 0.0
    %1504 = vmatpush1.msra.mxu0 0.0
    %1505 = vmatprep.subr.mxu0 0.0
    %1506 = vmatpush1.msra.mxu0 0.0
    %1507 = vmatprep.subr.mxu0 0.0
    %1508 = vmatpush1.msra.mxu0 0.0
    %1509 = vmatprep.subr.mxu0 0.0
    %1510 = vmatpush1.msra.mxu0 0.0
    %1511 = vmatprep.subr.mxu0 0.0
    %1512 = vmatpush1.msra.mxu0 0.0
    %1513 = vmatprep.subr.mxu0 0.0
    %1514 = vmatpush1.msra.mxu0 0.0
    %1515 = vmatprep.subr.mxu0 0.0
    %1516 = vmatpush1.msra.mxu0 0.0
    %1517 = vmatprep.subr.mxu0 0.0
    %1518 = vmatpush1.msra.mxu0 0.0
    %1519 = vmatprep.subr.mxu0 0.0
    %1520 = vmatpush1.msra.mxu0 0.0
    %1521 = vmatprep.subr.mxu0 0.0
    %1522 = vmatpush1.msra.mxu0 0.0
    %1523 = vmatprep.subr.mxu0 0.0
    %1524 = vmatpush1.msra.mxu0 0.0
    %1525 = vmatprep.subr.mxu0 0.0
    %1526 = vmatpush1.msra.mxu0 0.0
    %1527 = vmatprep.subr.mxu0 0.0
    %1528 = vmatpush1.msra.mxu0 0.0
    %1529 = vmatprep.subr.mxu0 0.0
    %1530 = vmatpush1.msra.mxu0 0.0
    %1531 = vmatprep.mubr.f32.mxu0 0.0
    %1532 = vmatmul.mubr.f32.gmra.mrb[0].mxu0 %v1465
    %v1533 = vpop.f32.mrb[0].mxu0
    %v1534 = vadd.f32 0.0, %v1533
    %v1535 = vpop.f32.mrb[0].mxu0
    %1536 = vdwg.mxu0
    %v1537 = vadd.f32 %v1005, %v1534
    %v1538 = vtanh.pop %v1537
    %1539 = vst [vmem:[#allocation2 + $0x30] sm:$0xff] %v1538
    %1540 = vmatprep.subr.mxu0 0.0
    %1541 = vmatpush1.msra.mxu0 %v1013
    %1542 = vmatprep.subr.mxu0 0.0
    %1543 = vmatpush1.msra.mxu0 %v1014
    %1544 = vmatprep.subr.mxu0 0.0
    %1545 = vmatpush1.msra.mxu0 %v1015
    %1546 = vmatprep.subr.mxu0 0.0
    %1547 = vmatpush1.msra.mxu0 %v1016
    %1548 = vmatprep.subr.mxu0 0.0
    %1549 = vmatpush1.msra.mxu0 %v1017
    %1550 = vmatprep.subr.mxu0 0.0
    %1551 = vmatpush1.msra.mxu0 %v1018
    %1552 = vmatprep.subr.mxu0 0.0
    %1553 = vmatpush1.msra.mxu0 %v1019
    %1554 = vmatprep.subr.mxu0 0.0
    %1555 = vmatpush1.msra.mxu0 %v1020
    %1556 = vmatprep.subr.mxu0 0.0
    %1557 = vmatpush1.msra.mxu0 %v1021
    %1558 = vmatprep.subr.mxu0 0.0
    %1559 = vmatpush1.msra.mxu0 %v1022
    %1560 = vmatprep.subr.mxu0 0.0
    %1561 = vmatpush1.msra.mxu0 %v1023
    %1562 = vmatprep.subr.mxu0 0.0
    %1563 = vmatpush1.msra.mxu0 %v1024
    %1564 = vmatprep.subr.mxu0 0.0
    %1565 = vmatpush1.msra.mxu0 %v1025
    %1566 = vmatprep.subr.mxu0 0.0
    %1567 = vmatpush1.msra.mxu0 %v1026
    %1568 = vmatprep.subr.mxu0 0.0
    %1569 = vmatpush1.msra.mxu0 %v1027
    %1570 = vmatprep.subr.mxu0 0.0
    %1571 = vmatpush1.msra.mxu0 %v1028
    %1572 = vmatprep.subr.mxu0 0.0
    %1573 = vmatpush1.msra.mxu0 0.0
    %1574 = vmatprep.subr.mxu0 0.0
    %1575 = vmatpush1.msra.mxu0 0.0
    %1576 = vmatprep.subr.mxu0 0.0
    %1577 = vmatpush1.msra.mxu0 0.0
    %1578 = vmatprep.subr.mxu0 0.0
    %1579 = vmatpush1.msra.mxu0 0.0
    %1580 = vmatprep.subr.mxu0 0.0
    %1581 = vmatpush1.msra.mxu0 0.0
    %1582 = vmatprep.subr.mxu0 0.0
    %1583 = vmatpush1.msra.mxu0 0.0
    %1584 = vmatprep.subr.mxu0 0.0
    %1585 = vmatpush1.msra.mxu0 0.0
    %1586 = vmatprep.subr.mxu0 0.0
    %1587 = vmatpush1.msra.mxu0 0.0
    %1588 = vmatprep.subr.mxu0 0.0
    %1589 = vmatpush1.msra.mxu0 0.0
    %1590 = vmatprep.subr.mxu0 0.0
    %1591 = vmatpush1.msra.mxu0 0.0
    %1592 = vmatprep.subr.mxu0 0.0
    %1593 = vmatpush1.msra.mxu0 0.0
    %1594 = vmatprep.subr.mxu0 0.0
    %1595 = vmatpush1.msra.mxu0 0.0
    %1596 = vmatprep.subr.mxu0 0.0
    %1597 = vmatpush1.msra.mxu0 0.0
    %1598 = vmatprep.subr.mxu0 0.0
    %1599 = vmatpush1.msra.mxu0 0.0
    %1600 = vmatprep.subr.mxu0 0.0
    %1601 = vmatpush1.msra.mxu0 0.0
    %1602 = vmatprep.subr.mxu0 0.0
    %1603 = vmatpush1.msra.mxu0 0.0
    %1604 = vmatprep.mubr.f32.mxu0 0.0
    %1605 = vmatmul.mubr.f32.gmra.mrb[0].mxu0 %v1538
    %v1606 = vpop.f32.mrb[0].mxu0
    %v1607 = vadd.f32 0.0, %v1606
    %v1608 = vpop.f32.mrb[0].mxu0
    %1609 = vdwg.mxu0
    %v1610 = vadd.f32 %v1010, %v1607
    %v1611 = vtanh.pop %v1610
    %1612 = vst [vmem:[#allocation2 + $0x38] sm:$0xff] %v1611
    %v1613 = vld [vmem:[#allocation2] sm:$0xff]
    %v1614 = vld [vmem:[#allocation2 + $0x8] sm:$0xff]
    %v1615 = vld [vmem:[#allocation2 + $0x10] sm:$0xff]
    %v1616 = vld [vmem:[#allocation2 + $0x18] sm:$0xff]
    %v1617 = vld [vmem:[#allocation2 + $0x20] sm:$0xff]
    %v1618 = vld [vmem:[#allocation2 + $0x28] sm:$0xff]
    %v1619 = vld [vmem:[#allocation2 + $0x30] sm:$0xff]
    %v1620 = vld [vmem:[#allocation2 + $0x38] sm:$0xff]
    %v1621 = vld [vmem:[#allocation11] sm:$0xff]
    %v1622 = vld [vmem:[#allocation11 + $0x8] sm:$0xff]
    %v1623 = vld [vmem:[#allocation11 + $0x10] sm:$0xff]
    %v1624 = vld [vmem:[#allocation11 + $0x18] sm:$0xff]
    %v1625 = vld [vmem:[#allocation11 + $0x20] sm:$0xff]
    %v1626 = vld [vmem:[#allocation11 + $0x28] sm:$0xff]
    %v1627 = vld [vmem:[#allocation11 + $0x30] sm:$0xff]
    %v1628 = vld [vmem:[#allocation11 + $0x38] sm:$0xff]
    %v1629 = vld [vmem:[#allocation11 + $0x40] sm:$0xff]
    %v1630 = vld [vmem:[#allocation11 + $0x48] sm:$0xff]
    %v1631 = vld [vmem:[#allocation11 + $0x50] sm:$0xff]
    %v1632 = vld [vmem:[#allocation11 + $0x58] sm:$0xff]
    %v1633 = vld [vmem:[#allocation11 + $0x60] sm:$0xff]
    %v1634 = vld [vmem:[#allocation11 + $0x68] sm:$0xff]
    %v1635 = vld [vmem:[#allocation11 + $0x70] sm:$0xff]
    %v1636 = vld [vmem:[#allocation11 + $0x78] sm:$0xff]
    %v1637 = vld [vmem:[%s7] sm:$0x1]
    %v1639 = vlaneseq
    %v1640 = vshrl.u32 %v1639, 7
    %v1641 = vsub.s32 0, %v1640
    %v1642 = vrot.slane %v1637, %v1641
    %1644 = vmatprep.subr.mxu0 0.0
    %1645 = vmatpush1.msra.mxu0 %v1621
    %1646 = vmatprep.subr.mxu0 0.0
    %1647 = vmatpush1.msra.mxu0 %v1622
    %1648 = vmatprep.subr.mxu0 0.0
    %1649 = vmatpush1.msra.mxu0 %v1623
    %1650 = vmatprep.subr.mxu0 0.0
    %1651 = vmatpush1.msra.mxu0 %v1624
    %1652 = vmatprep.subr.mxu0 0.0
    %1653 = vmatpush1.msra.mxu0 %v1625
    %1654 = vmatprep.subr.mxu0 0.0
    %1655 = vmatpush1.msra.mxu0 %v1626
    %1656 = vmatprep.subr.mxu0 0.0
    %1657 = vmatpush1.msra.mxu0 %v1627
    %1658 = vmatprep.subr.mxu0 0.0
    %1659 = vmatpush1.msra.mxu0 %v1628
    %1660 = vmatprep.subr.mxu0 0.0
    %1661 = vmatpush1.msra.mxu0 %v1629
    %1662 = vmatprep.subr.mxu0 0.0
    %1663 = vmatpush1.msra.mxu0 %v1630
    %1664 = vmatprep.subr.mxu0 0.0
    %1665 = vmatpush1.msra.mxu0 %v1631
    %1666 = vmatprep.subr.mxu0 0.0
    %1667 = vmatpush1.msra.mxu0 %v1632
    %1668 = vmatprep.subr.mxu0 0.0
    %1669 = vmatpush1.msra.mxu0 %v1633
    %1670 = vmatprep.subr.mxu0 0.0
    %1671 = vmatpush1.msra.mxu0 %v1634
    %1672 = vmatprep.subr.mxu0 0.0
    %1673 = vmatpush1.msra.mxu0 %v1635
    %1674 = vmatprep.subr.mxu0 0.0
    %1675 = vmatpush1.msra.mxu0 %v1636
    %1676 = vmatprep.subr.mxu0 0.0
    %1677 = vmatpush1.msra.mxu0 0.0
    %1678 = vmatprep.subr.mxu0 0.0
    %1679 = vmatpush1.msra.mxu0 0.0
    %1680 = vmatprep.subr.mxu0 0.0
    %1681 = vmatpush1.msra.mxu0 0.0
    %1682 = vmatprep.subr.mxu0 0.0
    %1683 = vmatpush1.msra.mxu0 0.0
    %1684 = vmatprep.subr.mxu0 0.0
    %1685 = vmatpush1.msra.mxu0 0.0
    %1686 = vmatprep.subr.mxu0 0.0
    %1687 = vmatpush1.msra.mxu0 0.0
    %1688 = vmatprep.subr.mxu0 0.0
    %1689 = vmatpush1.msra.mxu0 0.0
    %1690 = vmatprep.subr.mxu0 0.0
    %1691 = vmatpush1.msra.mxu0 0.0
    %1692 = vmatprep.subr.mxu0 0.0
    %1693 = vmatpush1.msra.mxu0 0.0
    %1694 = vmatprep.subr.mxu0 0.0
    %1695 = vmatpush1.msra.mxu0 0.0
    %1696 = vmatprep.subr.mxu0 0.0
    %1697 = vmatpush1.msra.mxu0 0.0
    %1698 = vmatprep.subr.mxu0 0.0
    %1699 = vmatpush1.msra.mxu0 0.0
    %1700 = vmatprep.subr.mxu0 0.0
    %1701 = vmatpush1.msra.mxu0 0.0
    %1702 = vmatprep.subr.mxu0 0.0
    %1703 = vmatpush1.msra.mxu0 0.0
    %1704 = vmatprep.subr.mxu0 0.0
    %1705 = vmatpush1.msra.mxu0 0.0
    %1706 = vmatprep.subr.mxu0 0.0
    %1707 = vmatpush1.msra.mxu0 0.0
    %1708 = vmatprep.mubr.f32.mxu0 0.0
    %1709 = vmatmul.mubr.f32.gmra.mrb[0].mxu0 %v1613
    %v1710 = vpop.f32.mrb[0].mxu0
    %v1711 = vadd.f32 %v1642, %v1710
    %v1712 = vpop.f32.mrb[0].mxu0
    %1713 = vmatprep.mubr.f32.mxu0 0.0
    %1714 = vmatmul.mubr.f32.gmra.mrb[0].mxu0 %v1614
    %v1715 = vpop.f32.mrb[0].mxu0
    %v1716 = vadd.f32 %v1642, %v1715
    %v1717 = vpop.f32.mrb[0].mxu0
    %1718 = vmatprep.mubr.f32.mxu0 0.0
    %1719 = vmatmul.mubr.f32.gmra.mrb[0].mxu0 %v1615
    %v1720 = vpop.f32.mrb[0].mxu0
    %v1721 = vadd.f32 %v1642, %v1720
    %v1722 = vpop.f32.mrb[0].mxu0
    %1723 = vmatprep.mubr.f32.mxu0 0.0
    %1724 = vmatmul.mubr.f32.gmra.mrb[0].mxu0 %v1616
    %v1725 = vpop.f32.mrb[0].mxu0
    %v1726 = vadd.f32 %v1642, %v1725
    %v1727 = vpop.f32.mrb[0].mxu0
    %1728 = vmatprep.mubr.f32.mxu0 0.0
    %1729 = vmatmul.mubr.f32.gmra.mrb[0].mxu0 %v1617
    %v1730 = vpop.f32.mrb[0].mxu0
    %v1731 = vadd.f32 %v1642, %v1730
    %v1732 = vpop.f32.mrb[0].mxu0
    %1733 = vmatprep.mubr.f32.mxu0 0.0
    %1734 = vmatmul.mubr.f32.gmra.mrb[0].mxu0 %v1618
    %v1735 = vpop.f32.mrb[0].mxu0
    %v1736 = vadd.f32 %v1642, %v1735
    %v1737 = vpop.f32.mrb[0].mxu0
    %1738 = vmatprep.mubr.f32.mxu0 0.0
    %1739 = vmatmul.mubr.f32.gmra.mrb[0].mxu0 %v1619
    %v1740 = vpop.f32.mrb[0].mxu0
    %v1741 = vadd.f32 %v1642, %v1740
    %v1742 = vpop.f32.mrb[0].mxu0
    %1743 = vmatprep.mubr.f32.mxu0 0.0
    %1744 = vmatmul.mubr.f32.gmra.mrb[0].mxu0 %v1620
    %v1745 = vpop.f32.mrb[0].mxu0
    %v1746 = vadd.f32 %v1642, %v1745
    %v1747 = vpop.f32.mrb[0].mxu0
    %1748 = vdwg.mxu0
    %1749 = vst [vmem:[#allocation12] sm:$0xff] %v1711
    %1750 = vst [vmem:[#allocation12 + $0x8] sm:$0xff] %v1716
    %1751 = vst [vmem:[#allocation12 + $0x10] sm:$0xff] %v1721
    %1752 = vst [vmem:[#allocation12 + $0x18] sm:$0xff] %v1726
    %1753 = vst [vmem:[#allocation12 + $0x20] sm:$0xff] %v1731
    %1754 = vst [vmem:[#allocation12 + $0x28] sm:$0xff] %v1736
    %1755 = vst [vmem:[#allocation12 + $0x30] sm:$0xff] %v1741
    %1756 = vst [vmem:[#allocation12 + $0x38] sm:$0xff] %v1746
    // Predicated region
    $region54: #{tpu_custom_call.1} parent=1 // pred_check
      _
    $region55: #{tpu_custom_call.1} parent=1 // pred_check_branch
      %1758 = sbr.rel (0) target = $region57
    $region56: #{tpu_custom_call.1} parent=1 // pred_region
      %s1760 = ssub.s32 1024, 1024
      %1761 = vsyncadd [#allocation5], %s1760
      %s1762 = sshll.u32 [#allocation12], 4
      %s1763 = int_to_ptr.vmem [resolvable:$true] %s1762
      %1768 = dma.vmem_to_hbm [thread:$0]  %s1763, 1024, %s8, [#allocation5], 128, 128, 8
    $region57: #{tpu_custom_call.1} parent=1 // pred_fallthru
      _
    // Predicated region
    $region58: #{tpu_custom_call.1} parent=1 // pred_check
      _
    $region59: #{tpu_custom_call.1} parent=1 // pred_check_branch
      %1770 = sbr.rel (0) target = $region61
    $region60: #{tpu_custom_call.1} parent=1 // pred_region
      %1771 = dma.done [#allocation5], 1024
    $region61: #{tpu_custom_call.1} parent=1 // pred_fallthru
      _
    %1772 = vsyncpa [#allocation4], 1
    %1773 = vsyncpa [#allocation7], 1
    %1774 = vsyncpa [#allocation10], 1
    %1775 = vsyncpa [#allocation5], 1

</llo_original>
